<compile_context>
chip_gen: v5e
topology: v5e:2x2
jax: 0.10.0
libtpu: 0.0.40
codegen_flags: <defaults>
</compile_context>

<pallas_src>
import functools

import jax
import jax.numpy as jnp
from jax.experimental import pallas as pl
from jax.experimental.pallas import tpu as pltpu

LN_EPS = 1e-5            # torch.nn.LayerNorm default
_INV_SQRT2 = 0.7071067811865475


def _erf_approx_f32(x):
    # Abramowitz & Stegun 7.1.26 rational approximation of erf, |err| <= 1.5e-7.
    # Only VPU (+/-/*, where) and EUP (exp) ops -> lowers on every TPU gen.
    a1, a2, a3, a4, a5 = (0.254829592, -0.284496736, 1.421413741,
                          -1.453152027, 1.061405429)
    p = 0.3275911
    ax = jnp.abs(x)
    t = 1.0 / (1.0 + p * ax)
    poly = ((((a5 * t + a4) * t + a3) * t + a2) * t + a1) * t
    y = 1.0 - poly * jnp.exp(-ax * ax)
    return jnp.where(x < 0.0, -y, y)


def _gelu_exact_f32(x):
    # Exact (erf-based) GELU, matching torch.nn.GELU() default (approximate='none').
    return 0.5 * x * (1.0 + _erf_approx_f32(x * _INV_SQRT2))


def _mlp_proj_norm_kernel(x_ref, w1_ref, b1_ref, w2_ref, b2_ref, g_ref, beta_ref,
                          o_ref, *, num_tokens, cross_attention_dim):
    # x_ref:    (B, D_in)       id embeddings
    # w1_ref:   (D_in, H)       first linear weight (H = 2*D_in), (in, out) layout
    # b1_ref:   (1, H)
    # w2_ref:   (H, T*C)        second linear weight, (in, out) layout
    # b2_ref:   (1, T*C)
    # g_ref:    (1, C)          LayerNorm gamma
    # beta_ref: (1, C)          LayerNorm beta
    # o_ref:    (B, T*C)        lane-dense output slab
    T, C = num_tokens, cross_attention_dim

    # Linear 1 + exact GELU (native-dtype operands, f32 MXU accumulation).
    h = jnp.dot(x_ref[...], w1_ref[...], preferred_element_type=jnp.float32)
    h = h + b1_ref[...].astype(jnp.float32)
    h = _gelu_exact_f32(h)

    # Linear 2: one wide (B, T*C) MXU pass.
    y = jnp.dot(h.astype(w2_ref.dtype), w2_ref[...],
                preferred_element_type=jnp.float32)
    y = y + b2_ref[...].astype(jnp.float32)

    g = g_ref[...].astype(jnp.float32)
    beta = beta_ref[...].astype(jnp.float32)

    # Per-token LayerNorm over 128-lane-aligned slices (static loop, C % 128 == 0).
    for t in range(T):
        yt = y[:, t * C:(t + 1) * C]
        mean = jnp.mean(yt, axis=-1, keepdims=True)
        centered = yt - mean
        var = jnp.mean(centered * centered, axis=-1, keepdims=True)
        out = centered * jax.lax.rsqrt(var + LN_EPS) * g + beta
        o_ref[:, t * C:(t + 1) * C] = out.astype(o_ref.dtype)


def mlp_proj_model_forward(id_embeds, w1, b1, w2, b2, ln_w, ln_b,
                           *, num_tokens, cross_attention_dim):
    """Pallas forward for MLPProjModel.

    id_embeds: (B, id_embeddings_dim)
    w1:        (id_embeddings_dim, 2*id_embeddings_dim)   (in, out) layout
    b1:        (2*id_embeddings_dim,)
    w2:        (2*id_embeddings_dim, num_tokens*cross_attention_dim)
    b2:        (num_tokens*cross_attention_dim,)
    ln_w,ln_b: (cross_attention_dim,)
    returns    (B, num_tokens, cross_attention_dim)
    """
    B, D_in = id_embeds.shape
    H = w1.shape[1]
    T, C = num_tokens, cross_attention_dim
    assert w1.shape == (D_in, H)
    assert w2.shape == (H, T * C)
    assert C % 128 == 0, "cross_attention_dim must be lane-aligned (multiple of 128)"

    b1_2 = b1.reshape(1, H)
    b2_2 = b2.reshape(1, T * C)
    g2 = ln_w.reshape(1, C)
    beta2 = ln_b.reshape(1, C)

    kernel = functools.partial(_mlp_proj_norm_kernel,
                               num_tokens=T, cross_attention_dim=C)

    def _nbytes(a):
        return a.size * a.dtype.itemsize

    cost = pl.CostEstimate(
        flops=2 * B * D_in * H + 2 * B * H * T * C,
        transcendentals=B * H,  # one exp per GELU element
        bytes_accessed=(_nbytes(id_embeds) + _nbytes(w1) + _nbytes(w2)
                        + _nbytes(b1) + _nbytes(b2) + _nbytes(ln_w) + _nbytes(ln_b)
                        + B * T * C * id_embeds.dtype.itemsize),
    )

    vmem = lambda: pl.BlockSpec(memory_space=pltpu.MemorySpace.VMEM)

    out_flat = pl.pallas_call(
        kernel,
        out_shape=jax.ShapeDtypeStruct((B, T * C), id_embeds.dtype),
        in_specs=[vmem() for _ in range(7)],
        out_specs=vmem(),
        cost_estimate=cost,
    )(id_embeds, w1, b1_2, w2, b2_2, g2, beta2)

    # (B, T*C) -> (B, T, C): bitwise no-op reshape, matches torch's .reshape(-1, T, C).
    return out_flat.reshape(B, T, C)


def _reference_forward(id_embeds, w1, b1, w2, b2, ln_w, ln_b, T, C):
    h = id_embeds @ w1 + b1
    h = jax.nn.gelu(h, approximate=False)      # exact GELU, like torch.nn.GELU()
    y = h @ w2 + b2
    y = y.reshape(-1, T, C)
    mean = jnp.mean(y, axis=-1, keepdims=True)
    var = jnp.mean((y - mean) ** 2, axis=-1, keepdims=True)
    return (y - mean) / jnp.sqrt(var + LN_EPS) * ln_w + ln_b


if __name__ == "__main__":
    # Small, TPU-friendly shapes consistent with the module (dims multiples of 128/8).
    B = 8
    id_embeddings_dim = 256
    cross_attention_dim = 128
    num_tokens = 4
    hidden = id_embeddings_dim * 2          # 512, as in the module
    T, C = num_tokens, cross_attention_dim

    key = jax.random.PRNGKey(0)
    k_x, k_w1, k_b1, k_w2, k_b2 = jax.random.split(key, 5)

    id_embeds = jax.random.normal(k_x, (B, id_embeddings_dim), dtype=jnp.float32)

    # torch.nn.Linear default init: uniform(-1/sqrt(fan_in), 1/sqrt(fan_in)).
    bound1 = 1.0 / float(id_embeddings_dim) ** 0.5
    w1 = jax.random.uniform(k_w1, (id_embeddings_dim, hidden),
                            minval=-bound1, maxval=bound1, dtype=jnp.float32)
    b1 = jax.random.uniform(k_b1, (hidden,),
                            minval=-bound1, maxval=bound1, dtype=jnp.float32)
    bound2 = 1.0 / float(hidden) ** 0.5
    w2 = jax.random.uniform(k_w2, (hidden, T * C),
                            minval=-bound2, maxval=bound2, dtype=jnp.float32)
    b2 = jax.random.uniform(k_b2, (T * C,),
                            minval=-bound2, maxval=bound2, dtype=jnp.float32)
    # torch.nn.LayerNorm defaults: weight = 1, bias = 0.
    ln_w = jnp.ones((C,), dtype=jnp.float32)
    ln_b = jnp.zeros((C,), dtype=jnp.float32)

    out = mlp_proj_model_forward(id_embeds, w1, b1, w2, b2, ln_w, ln_b,
                                 num_tokens=T, cross_attention_dim=C)
    out = jax.block_until_ready(out)

    ref = _reference_forward(id_embeds, w1, b1, w2, b2, ln_w, ln_b, T, C)
    assert out.shape == (B, T, C), out.shape
    max_err = float(jnp.max(jnp.abs(out - ref)))
    assert jnp.allclose(out, ref, atol=5e-4, rtol=5e-4), (
        f"mismatch vs reference (max abs err {max_err})")

    print("KERNEL_OK")
</pallas_src>

<mosaic_0001>
module attributes {stable_mosaic.version = 11 : i64} {
  func.func @_mlp_proj_norm_kernel(%arg0: memref<8x256xf32, #tpu.memory_space<vmem>>, %arg1: memref<256x512xf32, #tpu.memory_space<vmem>>, %arg2: memref<1x512xf32, #tpu.memory_space<vmem>>, %arg3: memref<512x512xf32, #tpu.memory_space<vmem>>, %arg4: memref<1x512xf32, #tpu.memory_space<vmem>>, %arg5: memref<1x128xf32, #tpu.memory_space<vmem>>, %arg6: memref<1x128xf32, #tpu.memory_space<vmem>>, %arg7: memref<8x512xf32, #tpu.memory_space<vmem>>) attributes {dimension_semantics = [], scalar_prefetch = 0 : i64, scratch_operands = 0 : i64, tpu.core_type = #tpu.core_type<tc>} {
    %c0 = arith.constant 0 : index
    %c0_0 = arith.constant 0 : index
    %0 = vector.load %arg0[%c0, %c0_0] : memref<8x256xf32, #tpu.memory_space<vmem>>, vector<8x256xf32>
    %c0_1 = arith.constant 0 : index
    %c0_2 = arith.constant 0 : index
    %1 = vector.load %arg1[%c0_1, %c0_2] : memref<256x512xf32, #tpu.memory_space<vmem>>, vector<256x512xf32>
    %cst = arith.constant dense<0.000000e+00> : vector<8x512xf32>
    %2 = tpu.matmul %0, %1, %cst {dimension_numbers = #tpu.dot_dimension_numbers<[1], [0], [0], [1], [0, 0, 1, 1], [], []>} : vector<8x256xf32>, vector<256x512xf32>, vector<8x512xf32> -> vector<8x512xf32>
    %c0_3 = arith.constant 0 : index
    %c0_4 = arith.constant 0 : index
    %3 = vector.load %arg2[%c0_3, %c0_4] : memref<1x512xf32, #tpu.memory_space<vmem>>, vector<1x512xf32>
    %4 = vector.broadcast %3 : vector<1x512xf32> to vector<8x512xf32>
    %5 = arith.addf %2, %4 : vector<8x512xf32>
    %cst_5 = arith.constant 5.000000e-01 : f32
    %6 = vector.broadcast %cst_5 : f32 to vector<8x512xf32>
    %7 = arith.mulf %6, %5 : vector<8x512xf32>
    %cst_6 = arith.constant 0.707106769 : f32
    %8 = vector.broadcast %cst_6 : f32 to vector<8x512xf32>
    %9 = arith.mulf %5, %8 : vector<8x512xf32>
    %10 = math.absf %9 : vector<8x512xf32>
    %cst_7 = arith.constant 0.327591091 : f32
    %11 = vector.broadcast %cst_7 : f32 to vector<8x512xf32>
    %12 = arith.mulf %11, %10 : vector<8x512xf32>
    %cst_8 = arith.constant 1.000000e+00 : f32
    %13 = vector.broadcast %cst_8 : f32 to vector<8x512xf32>
    %14 = arith.addf %13, %12 : vector<8x512xf32>
    %cst_9 = arith.constant 1.000000e+00 : f32
    %15 = vector.broadcast %cst_9 : f32 to vector<8x512xf32>
    %16 = arith.divf %15, %14 : vector<8x512xf32>
    %cst_10 = arith.constant 1.06140542 : f32
    %17 = vector.broadcast %cst_10 : f32 to vector<8x512xf32>
    %18 = arith.mulf %17, %16 : vector<8x512xf32>
    %cst_11 = arith.constant -1.45315206 : f32
    %19 = vector.broadcast %cst_11 : f32 to vector<8x512xf32>
    %20 = arith.addf %18, %19 : vector<8x512xf32>
    %21 = arith.mulf %20, %16 : vector<8x512xf32>
    %cst_12 = arith.constant 1.42141378 : f32
    %22 = vector.broadcast %cst_12 : f32 to vector<8x512xf32>
    %23 = arith.addf %21, %22 : vector<8x512xf32>
    %24 = arith.mulf %23, %16 : vector<8x512xf32>
    %cst_13 = arith.constant -0.284496725 : f32
    %25 = vector.broadcast %cst_13 : f32 to vector<8x512xf32>
    %26 = arith.addf %24, %25 : vector<8x512xf32>
    %27 = arith.mulf %26, %16 : vector<8x512xf32>
    %cst_14 = arith.constant 0.254829586 : f32
    %28 = vector.broadcast %cst_14 : f32 to vector<8x512xf32>
    %29 = arith.addf %27, %28 : vector<8x512xf32>
    %30 = arith.mulf %29, %16 : vector<8x512xf32>
    %cst_15 = arith.constant 0.000000e+00 : f32
    %31 = vector.broadcast %cst_15 : f32 to vector<8x512xf32>
    %32 = arith.subf %31, %10 : vector<8x512xf32>
    %33 = arith.mulf %32, %10 : vector<8x512xf32>
    %34 = math.exp %33 : vector<8x512xf32>
    %35 = arith.mulf %30, %34 : vector<8x512xf32>
    %cst_16 = arith.constant 1.000000e+00 : f32
    %36 = vector.broadcast %cst_16 : f32 to vector<8x512xf32>
    %37 = arith.subf %36, %35 : vector<8x512xf32>
    %cst_17 = arith.constant 0.000000e+00 : f32
    %38 = vector.broadcast %cst_17 : f32 to vector<8x512xf32>
    %39 = arith.cmpf olt, %9, %38 : vector<8x512xf32>
    %cst_18 = arith.constant 0.000000e+00 : f32
    %40 = vector.broadcast %cst_18 : f32 to vector<8x512xf32>
    %41 = arith.subf %40, %37 : vector<8x512xf32>
    %42 = arith.select %39, %41, %37 : vector<8x512xi1>, vector<8x512xf32>
    %cst_19 = arith.constant 1.000000e+00 : f32
    %43 = vector.broadcast %cst_19 : f32 to vector<8x512xf32>
    %44 = arith.addf %43, %42 : vector<8x512xf32>
    %45 = arith.mulf %7, %44 : vector<8x512xf32>
    %c0_20 = arith.constant 0 : index
    %c0_21 = arith.constant 0 : index
    %46 = vector.load %arg3[%c0_20, %c0_21] : memref<512x512xf32, #tpu.memory_space<vmem>>, vector<512x512xf32>
    %cst_22 = arith.constant dense<0.000000e+00> : vector<8x512xf32>
    %47 = tpu.matmul %45, %46, %cst_22 {dimension_numbers = #tpu.dot_dimension_numbers<[1], [0], [0], [1], [0, 0, 1, 1], [], []>} : vector<8x512xf32>, vector<512x512xf32>, vector<8x512xf32> -> vector<8x512xf32>
    %c0_23 = arith.constant 0 : index
    %c0_24 = arith.constant 0 : index
    %48 = vector.load %arg4[%c0_23, %c0_24] : memref<1x512xf32, #tpu.memory_space<vmem>>, vector<1x512xf32>
    %49 = vector.broadcast %48 : vector<1x512xf32> to vector<8x512xf32>
    %50 = arith.addf %47, %49 : vector<8x512xf32>
    %c0_25 = arith.constant 0 : index
    %c0_26 = arith.constant 0 : index
    %51 = vector.load %arg5[%c0_25, %c0_26] : memref<1x128xf32, #tpu.memory_space<vmem>>, vector<1x128xf32>
    %c0_27 = arith.constant 0 : index
    %c0_28 = arith.constant 0 : index
    %52 = vector.load %arg6[%c0_27, %c0_28] : memref<1x128xf32, #tpu.memory_space<vmem>>, vector<1x128xf32>
    %53 = vector.extract_strided_slice %50 {offsets = [0, 0], sizes = [8, 128], strides = [1, 1]} : vector<8x512xf32> to vector<8x128xf32>
    %cst_29 = arith.constant dense<0.000000e+00> : vector<8xf32>
    %54 = vector.multi_reduction <add>, %53, %cst_29 [1] : vector<8x128xf32> to vector<8xf32>
    %55 = vector.shape_cast %54 : vector<8xf32> to vector<8x1xf32>
    %cst_30 = arith.constant 1.280000e+02 : f32
    %56 = vector.broadcast %cst_30 : f32 to vector<8x1xf32>
    %57 = arith.divf %55, %56 : vector<8x1xf32>
    %58 = vector.broadcast %57 : vector<8x1xf32> to vector<8x128xf32>
    %59 = arith.subf %53, %58 : vector<8x128xf32>
    %60 = arith.mulf %59, %59 : vector<8x128xf32>
    %cst_31 = arith.constant dense<0.000000e+00> : vector<8xf32>
    %61 = vector.multi_reduction <add>, %60, %cst_31 [1] : vector<8x128xf32> to vector<8xf32>
    %62 = vector.shape_cast %61 : vector<8xf32> to vector<8x1xf32>
    %cst_32 = arith.constant 1.280000e+02 : f32
    %63 = vector.broadcast %cst_32 : f32 to vector<8x1xf32>
    %64 = arith.divf %62, %63 : vector<8x1xf32>
    %cst_33 = arith.constant 9.99999974E-6 : f32
    %65 = vector.broadcast %cst_33 : f32 to vector<8x1xf32>
    %66 = arith.addf %64, %65 : vector<8x1xf32>
    %67 = math.rsqrt %66 : vector<8x1xf32>
    %68 = vector.broadcast %67 : vector<8x1xf32> to vector<8x128xf32>
    %69 = arith.mulf %59, %68 : vector<8x128xf32>
    %70 = vector.broadcast %51 : vector<1x128xf32> to vector<8x128xf32>
    %71 = arith.mulf %69, %70 : vector<8x128xf32>
    %72 = vector.broadcast %52 : vector<1x128xf32> to vector<8x128xf32>
    %73 = arith.addf %71, %72 : vector<8x128xf32>
    %c0_34 = arith.constant 0 : index
    %c0_35 = arith.constant 0 : index
    %74 = vector.load %arg7[%c0_34, %c0_35] : memref<8x512xf32, #tpu.memory_space<vmem>>, vector<8x128xf32>
    tpu.vector_store %arg7[%c0_34, %c0_35], %73 {strides = array<i32>} : memref<8x512xf32, #tpu.memory_space<vmem>>, vector<8x128xf32>,
    %75 = vector.extract_strided_slice %50 {offsets = [0, 128], sizes = [8, 128], strides = [1, 1]} : vector<8x512xf32> to vector<8x128xf32>
    %cst_36 = arith.constant dense<0.000000e+00> : vector<8xf32>
    %76 = vector.multi_reduction <add>, %75, %cst_36 [1] : vector<8x128xf32> to vector<8xf32>
    %77 = vector.shape_cast %76 : vector<8xf32> to vector<8x1xf32>
    %cst_37 = arith.constant 1.280000e+02 : f32
    %78 = vector.broadcast %cst_37 : f32 to vector<8x1xf32>
    %79 = arith.divf %77, %78 : vector<8x1xf32>
    %80 = vector.broadcast %79 : vector<8x1xf32> to vector<8x128xf32>
    %81 = arith.subf %75, %80 : vector<8x128xf32>
    %82 = arith.mulf %81, %81 : vector<8x128xf32>
    %cst_38 = arith.constant dense<0.000000e+00> : vector<8xf32>
    %83 = vector.multi_reduction <add>, %82, %cst_38 [1] : vector<8x128xf32> to vector<8xf32>
    %84 = vector.shape_cast %83 : vector<8xf32> to vector<8x1xf32>
    %cst_39 = arith.constant 1.280000e+02 : f32
    %85 = vector.broadcast %cst_39 : f32 to vector<8x1xf32>
    %86 = arith.divf %84, %85 : vector<8x1xf32>
    %cst_40 = arith.constant 9.99999974E-6 : f32
    %87 = vector.broadcast %cst_40 : f32 to vector<8x1xf32>
    %88 = arith.addf %86, %87 : vector<8x1xf32>
    %89 = math.rsqrt %88 : vector<8x1xf32>
    %90 = vector.broadcast %89 : vector<8x1xf32> to vector<8x128xf32>
    %91 = arith.mulf %81, %90 : vector<8x128xf32>
    %92 = vector.broadcast %51 : vector<1x128xf32> to vector<8x128xf32>
    %93 = arith.mulf %91, %92 : vector<8x128xf32>
    %94 = vector.broadcast %52 : vector<1x128xf32> to vector<8x128xf32>
    %95 = arith.addf %93, %94 : vector<8x128xf32>
    %c0_41 = arith.constant 0 : index
    %c128 = arith.constant 128 : index
    %96 = vector.load %arg7[%c0_41, %c128] : memref<8x512xf32, #tpu.memory_space<vmem>>, vector<8x128xf32>
    tpu.vector_store %arg7[%c0_41, %c128], %95 {strides = array<i32>} : memref<8x512xf32, #tpu.memory_space<vmem>>, vector<8x128xf32>,
    %97 = vector.extract_strided_slice %50 {offsets = [0, 256], sizes = [8, 128], strides = [1, 1]} : vector<8x512xf32> to vector<8x128xf32>
    %cst_42 = arith.constant dense<0.000000e+00> : vector<8xf32>
    %98 = vector.multi_reduction <add>, %97, %cst_42 [1] : vector<8x128xf32> to vector<8xf32>
    %99 = vector.shape_cast %98 : vector<8xf32> to vector<8x1xf32>
    %cst_43 = arith.constant 1.280000e+02 : f32
    %100 = vector.broadcast %cst_43 : f32 to vector<8x1xf32>
    %101 = arith.divf %99, %100 : vector<8x1xf32>
    %102 = vector.broadcast %101 : vector<8x1xf32> to vector<8x128xf32>
    %103 = arith.subf %97, %102 : vector<8x128xf32>
    %104 = arith.mulf %103, %103 : vector<8x128xf32>
    %cst_44 = arith.constant dense<0.000000e+00> : vector<8xf32>
    %105 = vector.multi_reduction <add>, %104, %cst_44 [1] : vector<8x128xf32> to vector<8xf32>
    %106 = vector.shape_cast %105 : vector<8xf32> to vector<8x1xf32>
    %cst_45 = arith.constant 1.280000e+02 : f32
    %107 = vector.broadcast %cst_45 : f32 to vector<8x1xf32>
    %108 = arith.divf %106, %107 : vector<8x1xf32>
    %cst_46 = arith.constant 9.99999974E-6 : f32
    %109 = vector.broadcast %cst_46 : f32 to vector<8x1xf32>
    %110 = arith.addf %108, %109 : vector<8x1xf32>
    %111 = math.rsqrt %110 : vector<8x1xf32>
    %112 = vector.broadcast %111 : vector<8x1xf32> to vector<8x128xf32>
    %113 = arith.mulf %103, %112 : vector<8x128xf32>
    %114 = vector.broadcast %51 : vector<1x128xf32> to vector<8x128xf32>
    %115 = arith.mulf %113, %114 : vector<8x128xf32>
    %116 = vector.broadcast %52 : vector<1x128xf32> to vector<8x128xf32>
    %117 = arith.addf %115, %116 : vector<8x128xf32>
    %c0_47 = arith.constant 0 : index
    %c256 = arith.constant 256 : index
    %118 = vector.load %arg7[%c0_47, %c256] : memref<8x512xf32, #tpu.memory_space<vmem>>, vector<8x128xf32>
    tpu.vector_store %arg7[%c0_47, %c256], %117 {strides = array<i32>} : memref<8x512xf32, #tpu.memory_space<vmem>>, vector<8x128xf32>,
    %119 = vector.extract_strided_slice %50 {offsets = [0, 384], sizes = [8, 128], strides = [1, 1]} : vector<8x512xf32> to vector<8x128xf32>
    %cst_48 = arith.constant dense<0.000000e+00> : vector<8xf32>
    %120 = vector.multi_reduction <add>, %119, %cst_48 [1] : vector<8x128xf32> to vector<8xf32>
    %121 = vector.shape_cast %120 : vector<8xf32> to vector<8x1xf32>
    %cst_49 = arith.constant 1.280000e+02 : f32
    %122 = vector.broadcast %cst_49 : f32 to vector<8x1xf32>
    %123 = arith.divf %121, %122 : vector<8x1xf32>
    %124 = vector.broadcast %123 : vector<8x1xf32> to vector<8x128xf32>
    %125 = arith.subf %119, %124 : vector<8x128xf32>
    %126 = arith.mulf %125, %125 : vector<8x128xf32>
    %cst_50 = arith.constant dense<0.000000e+00> : vector<8xf32>
    %127 = vector.multi_reduction <add>, %126, %cst_50 [1] : vector<8x128xf32> to vector<8xf32>
    %128 = vector.shape_cast %127 : vector<8xf32> to vector<8x1xf32>
    %cst_51 = arith.constant 1.280000e+02 : f32
    %129 = vector.broadcast %cst_51 : f32 to vector<8x1xf32>
    %130 = arith.divf %128, %129 : vector<8x1xf32>
    %cst_52 = arith.constant 9.99999974E-6 : f32
    %131 = vector.broadcast %cst_52 : f32 to vector<8x1xf32>
    %132 = arith.addf %130, %131 : vector<8x1xf32>
    %133 = math.rsqrt %132 : vector<8x1xf32>
    %134 = vector.broadcast %133 : vector<8x1xf32> to vector<8x128xf32>
    %135 = arith.mulf %125, %134 : vector<8x128xf32>
    %136 = vector.broadcast %51 : vector<1x128xf32> to vector<8x128xf32>
    %137 = arith.mulf %135, %136 : vector<8x128xf32>
    %138 = vector.broadcast %52 : vector<1x128xf32> to vector<8x128xf32>
    %139 = arith.addf %137, %138 : vector<8x128xf32>
    %c0_53 = arith.constant 0 : index
    %c384 = arith.constant 384 : index
    %140 = vector.load %arg7[%c0_53, %c384] : memref<8x512xf32, #tpu.memory_space<vmem>>, vector<8x128xf32>
    tpu.vector_store %arg7[%c0_53, %c384], %139 {strides = array<i32>} : memref<8x512xf32, #tpu.memory_space<vmem>>, vector<8x128xf32>,
    return
  }
}

</mosaic_0001>

<llo_original>
// kernel: tpu_custom_call.1
$region0: #{tpu_custom_call.1}
  #allocation0 [shape = 'u32[]', space=smem, size = 0x4, offset = 0x4, fixed_abs, tag = 'smem constant byte address 0x4 - core index']
  #allocation1 [shape = 'u32[72,128]{1,0:T(1,128)}', space=vmem, size = 0x9000, scoped, tag = 'internal scratch']
  %s0 = inlined_call_operand.hbm [shape: f32[8,256], index: 0, kind: input, shape index: {}]
  %s1 = inlined_call_operand.hbm [shape: f32[256,512], index: 1, kind: input, shape index: {}]
  %s2 = inlined_call_operand.hbm [shape: f32[1,512], index: 2, kind: input, shape index: {}]
  %s3 = inlined_call_operand.hbm [shape: f32[512,512], index: 3, kind: input, shape index: {}]
  %s4 = inlined_call_operand.hbm [shape: f32[1,512], index: 4, kind: input, shape index: {}]
  %s5 = inlined_call_operand.vmem [shape: f32[1,128], index: 5, kind: input, shape index: {}]
  %s6 = inlined_call_operand.vmem [shape: f32[1,128], index: 6, kind: input, shape index: {}]
  %s7 = inlined_call_operand.hbm [shape: f32[8,512], index: 7, kind: output, shape index: {}]
  %s8 = sld [smem:[#allocation0]]
  $region58: #{tpu_custom_call.1} parent=0
    _
  %s10 = ssub.s32 1, %s8
  %s11 = scalar_select 0, %s10, %s8
  $region1: #{tpu_custom_call.1} parent=0
    #allocation2 [shape = 'u8[8192]{0}', space=vmem, size = 0x2000, scoped, tag = 'input window, operand 0, single buffered']
    #allocation3 [shape = 's32[1]{0}', space=sflag, size = 0x4, scoped, tag = 'scoped memory for tpu_custom_call.1']
    #allocation4 [shape = 's32[1]{0}', space=sflag, size = 0x4, scoped, tag = 'scoped memory for tpu_custom_call.1']
    #allocation5 [shape = 'u8[524288]{0}', space=vmem, size = 0x80000, scoped, tag = 'input window, operand 1, single buffered']
    #allocation6 [shape = 's32[1]{0}', space=sflag, size = 0x4, scoped, tag = 'scoped memory for tpu_custom_call.1']
    #allocation7 [shape = 'u8[2048]{0}', space=vmem, size = 0x800, scoped, tag = 'input window, operand 2, single buffered']
    #allocation8 [shape = 'u8[1048576]{0}', space=vmem, size = 0x100000, scoped, tag = 'input window, operand 3, single buffered']
    #allocation9 [shape = 's32[1]{0}', space=sflag, size = 0x4, scoped, tag = 'scoped memory for tpu_custom_call.1']
    #allocation10 [shape = 'u8[2048]{0}', space=vmem, size = 0x800, scoped, tag = 'input window, operand 4, single buffered']
    #allocation11 [shape = 'u8[16384]{0}', space=vmem, size = 0x4000, scoped, tag = 'output window, operand 0, single buffered']
    %12 = vsyncpa [#allocation3], 0
    %13 = vsyncpa [#allocation6], 0
    %14 = vsyncpa [#allocation9], 0
    %15 = vsyncpa [#allocation4], 0
    // Predicated region
    $region2: #{tpu_custom_call.1} parent=1 // pred_check
      _
    $region3: #{tpu_custom_call.1} parent=1 // pred_check_branch
      %17 = sbr.rel (0) target = $region5
    $region4: #{tpu_custom_call.1} parent=1 // pred_region
      %19 = vsyncadd [#allocation3], 0
      %s21 = sshll.u32 %s0, 4
      %s22 = int_to_ptr.hbm [resolvable:$true] %s21
      %s23 = sshll.u32 [#allocation2], 4
      %s24 = int_to_ptr.vmem [resolvable:$true] %s23
      %26 = dma.hbm_to_vmem [thread:$0]  %s22, 256, %s24, [#allocation3]
    $region5: #{tpu_custom_call.1} parent=1 // pred_fallthru
      _
    // Predicated region
    $region6: #{tpu_custom_call.1} parent=1 // pred_check
      _
    $region7: #{tpu_custom_call.1} parent=1 // pred_check_branch
      %28 = sbr.rel (0) target = $region9
    $region8: #{tpu_custom_call.1} parent=1 // pred_region
      %30 = vsyncadd [#allocation6], 0
      %s31 = sshll.u32 %s1, 4
      %s32 = int_to_ptr.hbm [resolvable:$true] %s31
      %s33 = sshll.u32 [#allocation5], 4
      %s34 = int_to_ptr.vmem [resolvable:$true] %s33
      %39 = dma.hbm_to_vmem [thread:$0]  %s32, 16384, %s34, [#allocation6], 512, 512, 32
    $region9: #{tpu_custom_call.1} parent=1 // pred_fallthru
      _
    // Predicated region
    $region10: #{tpu_custom_call.1} parent=1 // pred_check
      _
    $region11: #{tpu_custom_call.1} parent=1 // pred_check_branch
      %41 = sbr.rel (0) target = $region13
    $region12: #{tpu_custom_call.1} parent=1 // pred_region
      %43 = vsyncadd [#allocation6], 0
      %s45 = sshll.u32 %s2, 4
      %s46 = int_to_ptr.hbm [resolvable:$true] %s45
      %s47 = sshll.u32 [#allocation7], 4
      %s48 = int_to_ptr.vmem [resolvable:$true] %s47
      %50 = dma.hbm_to_vmem [thread:$0]  %s46, 64, %s48, [#allocation6]
    $region13: #{tpu_custom_call.1} parent=1 // pred_fallthru
      _
    // Predicated region
    $region14: #{tpu_custom_call.1} parent=1 // pred_check
      _
    $region15: #{tpu_custom_call.1} parent=1 // pred_check_branch
      %52 = sbr.rel (0) target = $region17
    $region16: #{tpu_custom_call.1} parent=1 // pred_region
      %54 = vsyncadd [#allocation9], 0
      %s55 = sshll.u32 %s3, 4
      %s56 = int_to_ptr.hbm [resolvable:$true] %s55
      %s57 = sshll.u32 [#allocation8], 4
      %s58 = int_to_ptr.vmem [resolvable:$true] %s57
      %63 = dma.hbm_to_vmem [thread:$0]  %s56, 32768, %s58, [#allocation9], 512, 512, 32
    $region17: #{tpu_custom_call.1} parent=1 // pred_fallthru
      _
    // Predicated region
    $region18: #{tpu_custom_call.1} parent=1 // pred_check
      _
    $region19: #{tpu_custom_call.1} parent=1 // pred_check_branch
      %65 = sbr.rel (0) target = $region21
    $region20: #{tpu_custom_call.1} parent=1 // pred_region
      %67 = vsyncadd [#allocation9], 0
      %s69 = sshll.u32 %s4, 4
      %s70 = int_to_ptr.hbm [resolvable:$true] %s69
      %s71 = sshll.u32 [#allocation10], 4
      %s72 = int_to_ptr.vmem [resolvable:$true] %s71
      %74 = dma.hbm_to_vmem [thread:$0]  %s70, 64, %s72, [#allocation9]
    $region21: #{tpu_custom_call.1} parent=1 // pred_fallthru
      _
    // Predicated region
    $region22: #{tpu_custom_call.1} parent=1 // pred_check
      _
    $region23: #{tpu_custom_call.1} parent=1 // pred_check_branch
      %76 = sbr.rel (0) target = $region25
    $region24: #{tpu_custom_call.1} parent=1 // pred_region
      _
    $region25: #{tpu_custom_call.1} parent=1 // pred_fallthru
      _
    // Predicated region
    $region26: #{tpu_custom_call.1} parent=1 // pred_check
      _
    $region27: #{tpu_custom_call.1} parent=1 // pred_check_branch
      %78 = sbr.rel (0) target = $region29
    $region28: #{tpu_custom_call.1} parent=1 // pred_region
      _
    $region29: #{tpu_custom_call.1} parent=1 // pred_fallthru
      _
    // Predicated region
    $region30: #{tpu_custom_call.1} parent=1 // pred_check
      _
    $region31: #{tpu_custom_call.1} parent=1 // pred_check_branch
      %80 = sbr.rel (0) target = $region33
    $region32: #{tpu_custom_call.1} parent=1 // pred_region
      %82 = dma.done [#allocation3], 256
    $region33: #{tpu_custom_call.1} parent=1 // pred_fallthru
      _
    // Predicated region
    $region34: #{tpu_custom_call.1} parent=1 // pred_check
      _
    $region35: #{tpu_custom_call.1} parent=1 // pred_check_branch
      %84 = sbr.rel (0) target = $region37
    $region36: #{tpu_custom_call.1} parent=1 // pred_region
      %86 = dma.done [#allocation6], 16384
    $region37: #{tpu_custom_call.1} parent=1 // pred_fallthru
      _
    // Predicated region
    $region38: #{tpu_custom_call.1} parent=1 // pred_check
      _
    $region39: #{tpu_custom_call.1} parent=1 // pred_check_branch
      %88 = sbr.rel (0) target = $region41
    $region40: #{tpu_custom_call.1} parent=1 // pred_region
      %90 = dma.done [#allocation6], 64
    $region41: #{tpu_custom_call.1} parent=1 // pred_fallthru
      _
    // Predicated region
    $region42: #{tpu_custom_call.1} parent=1 // pred_check
      _
    $region43: #{tpu_custom_call.1} parent=1 // pred_check_branch
      %92 = sbr.rel (0) target = $region45
    $region44: #{tpu_custom_call.1} parent=1 // pred_region
      %94 = dma.done [#allocation9], 32768
    $region45: #{tpu_custom_call.1} parent=1 // pred_fallthru
      _
    // Predicated region
    $region46: #{tpu_custom_call.1} parent=1 // pred_check
      _
    $region47: #{tpu_custom_call.1} parent=1 // pred_check_branch
      %96 = sbr.rel (0) target = $region49
    $region48: #{tpu_custom_call.1} parent=1 // pred_region
      %98 = dma.done [#allocation9], 64
    $region49: #{tpu_custom_call.1} parent=1 // pred_fallthru
      _
    %v99 = vld [vmem:[#allocation2] sm:$0xff]
    %v100 = vld [vmem:[#allocation2 + $0x8] sm:$0xff]
    %v101 = vld [vmem:[#allocation5] sm:$0xff]
    %v102 = vld [vmem:[#allocation5 + $0x8] sm:$0xff]
    %v103 = vld [vmem:[#allocation5 + $0x10] sm:$0xff]
    %v104 = vld [vmem:[#allocation5 + $0x18] sm:$0xff]
    %v105 = vld [vmem:[#allocation5 + $0x20] sm:$0xff]
    %v106 = vld [vmem:[#allocation5 + $0x28] sm:$0xff]
    %v107 = vld [vmem:[#allocation5 + $0x30] sm:$0xff]
    %v108 = vld [vmem:[#allocation5 + $0x38] sm:$0xff]
    %v109 = vld [vmem:[#allocation5 + $0x40] sm:$0xff]
    %v110 = vld [vmem:[#allocation5 + $0x48] sm:$0xff]
    %v111 = vld [vmem:[#allocation5 + $0x50] sm:$0xff]
    %v112 = vld [vmem:[#allocation5 + $0x58] sm:$0xff]
    %v113 = vld [vmem:[#allocation5 + $0x60] sm:$0xff]
    %v114 = vld [vmem:[#allocation5 + $0x68] sm:$0xff]
    %v115 = vld [vmem:[#allocation5 + $0x70] sm:$0xff]
    %v116 = vld [vmem:[#allocation5 + $0x78] sm:$0xff]
    %v117 = vld [vmem:[#allocation5 + $0x80] sm:$0xff]
    %v118 = vld [vmem:[#allocation5 + $0x88] sm:$0xff]
    %v119 = vld [vmem:[#allocation5 + $0x90] sm:$0xff]
    %v120 = vld [vmem:[#allocation5 + $0x98] sm:$0xff]
    %v121 = vld [vmem:[#allocation5 + $0xa0] sm:$0xff]
    %v122 = vld [vmem:[#allocation5 + $0xa8] sm:$0xff]
    %v123 = vld [vmem:[#allocation5 + $0xb0] sm:$0xff]
    %v124 = vld [vmem:[#allocation5 + $0xb8] sm:$0xff]
    %v125 = vld [vmem:[#allocation5 + $0xc0] sm:$0xff]
    %v126 = vld [vmem:[#allocation5 + $0xc8] sm:$0xff]
    %v127 = vld [vmem:[#allocation5 + $0xd0] sm:$0xff]
    %v128 = vld [vmem:[#allocation5 + $0xd8] sm:$0xff]
    %v129 = vld [vmem:[#allocation5 + $0xe0] sm:$0xff]
    %v130 = vld [vmem:[#allocation5 + $0xe8] sm:$0xff]
    %v131 = vld [vmem:[#allocation5 + $0xf0] sm:$0xff]
    %v132 = vld [vmem:[#allocation5 + $0xf8] sm:$0xff]
    %v133 = vld [vmem:[#allocation5 + $0x100] sm:$0xff]
    %v134 = vld [vmem:[#allocation5 + $0x108] sm:$0xff]
    %v135 = vld [vmem:[#allocation5 + $0x110] sm:$0xff]
    %v136 = vld [vmem:[#allocation5 + $0x118] sm:$0xff]
    %v137 = vld [vmem:[#allocation5 + $0x120] sm:$0xff]
    %v138 = vld [vmem:[#allocation5 + $0x128] sm:$0xff]
    %v139 = vld [vmem:[#allocation5 + $0x130] sm:$0xff]
    %v140 = vld [vmem:[#allocation5 + $0x138] sm:$0xff]
    %v141 = vld [vmem:[#allocation5 + $0x140] sm:$0xff]
    %v142 = vld [vmem:[#allocation5 + $0x148] sm:$0xff]
    %v143 = vld [vmem:[#allocation5 + $0x150] sm:$0xff]
    %v144 = vld [vmem:[#allocation5 + $0x158] sm:$0xff]
    %v145 = vld [vmem:[#allocation5 + $0x160] sm:$0xff]
    %v146 = vld [vmem:[#allocation5 + $0x168] sm:$0xff]
    %v147 = vld [vmem:[#allocation5 + $0x170] sm:$0xff]
    %v148 = vld [vmem:[#allocation5 + $0x178] sm:$0xff]
    %v149 = vld [vmem:[#allocation5 + $0x180] sm:$0xff]
    %v150 = vld [vmem:[#allocation5 + $0x188] sm:$0xff]
    %v151 = vld [vmem:[#allocation5 + $0x190] sm:$0xff]
    %v152 = vld [vmem:[#allocation5 + $0x198] sm:$0xff]
    %v153 = vld [vmem:[#allocation5 + $0x1a0] sm:$0xff]
    %v154 = vld [vmem:[#allocation5 + $0x1a8] sm:$0xff]
    %v155 = vld [vmem:[#allocation5 + $0x1b0] sm:$0xff]
    %v156 = vld [vmem:[#allocation5 + $0x1b8] sm:$0xff]
    %v157 = vld [vmem:[#allocation5 + $0x1c0] sm:$0xff]
    %v158 = vld [vmem:[#allocation5 + $0x1c8] sm:$0xff]
    %v159 = vld [vmem:[#allocation5 + $0x1d0] sm:$0xff]
    %v160 = vld [vmem:[#allocation5 + $0x1d8] sm:$0xff]
    %v161 = vld [vmem:[#allocation5 + $0x1e0] sm:$0xff]
    %v162 = vld [vmem:[#allocation5 + $0x1e8] sm:$0xff]
    %v163 = vld [vmem:[#allocation5 + $0x1f0] sm:$0xff]
    %v164 = vld [vmem:[#allocation5 + $0x1f8] sm:$0xff]
    %v165 = vld [vmem:[#allocation5 + $0x200] sm:$0xff]
    %v166 = vld [vmem:[#allocation5 + $0x208] sm:$0xff]
    %v167 = vld [vmem:[#allocation5 + $0x210] sm:$0xff]
    %v168 = vld [vmem:[#allocation5 + $0x218] sm:$0xff]
    %v169 = vld [vmem:[#allocation5 + $0x220] sm:$0xff]
    %v170 = vld [vmem:[#allocation5 + $0x228] sm:$0xff]
    %v171 = vld [vmem:[#allocation5 + $0x230] sm:$0xff]
    %v172 = vld [vmem:[#allocation5 + $0x238] sm:$0xff]
    %v173 = vld [vmem:[#allocation5 + $0x240] sm:$0xff]
    %v174 = vld [vmem:[#allocation5 + $0x248] sm:$0xff]
    %v175 = vld [vmem:[#allocation5 + $0x250] sm:$0xff]
    %v176 = vld [vmem:[#allocation5 + $0x258] sm:$0xff]
    %v177 = vld [vmem:[#allocation5 + $0x260] sm:$0xff]
    %v178 = vld [vmem:[#allocation5 + $0x268] sm:$0xff]
    %v179 = vld [vmem:[#allocation5 + $0x270] sm:$0xff]
    %v180 = vld [vmem:[#allocation5 + $0x278] sm:$0xff]
    %v181 = vld [vmem:[#allocation5 + $0x280] sm:$0xff]
    %v182 = vld [vmem:[#allocation5 + $0x288] sm:$0xff]
    %v183 = vld [vmem:[#allocation5 + $0x290] sm:$0xff]
    %v184 = vld [vmem:[#allocation5 + $0x298] sm:$0xff]
    %v185 = vld [vmem:[#allocation5 + $0x2a0] sm:$0xff]
    %v186 = vld [vmem:[#allocation5 + $0x2a8] sm:$0xff]
    %v187 = vld [vmem:[#allocation5 + $0x2b0] sm:$0xff]
    %v188 = vld [vmem:[#allocation5 + $0x2b8] sm:$0xff]
    %v189 = vld [vmem:[#allocation5 + $0x2c0] sm:$0xff]
    %v190 = vld [vmem:[#allocation5 + $0x2c8] sm:$0xff]
    %v191 = vld [vmem:[#allocation5 + $0x2d0] sm:$0xff]
    %v192 = vld [vmem:[#allocation5 + $0x2d8] sm:$0xff]
    %v193 = vld [vmem:[#allocation5 + $0x2e0] sm:$0xff]
    %v194 = vld [vmem:[#allocation5 + $0x2e8] sm:$0xff]
    %v195 = vld [vmem:[#allocation5 + $0x2f0] sm:$0xff]
    %v196 = vld [vmem:[#allocation5 + $0x2f8] sm:$0xff]
    %v197 = vld [vmem:[#allocation5 + $0x300] sm:$0xff]
    %v198 = vld [vmem:[#allocation5 + $0x308] sm:$0xff]
    %v199 = vld [vmem:[#allocation5 + $0x310] sm:$0xff]
    %v200 = vld [vmem:[#allocation5 + $0x318] sm:$0xff]
    %v201 = vld [vmem:[#allocation5 + $0x320] sm:$0xff]
    %v202 = vld [vmem:[#allocation5 + $0x328] sm:$0xff]
    %v203 = vld [vmem:[#allocation5 + $0x330] sm:$0xff]
    %v204 = vld [vmem:[#allocation5 + $0x338] sm:$0xff]
    %v205 = vld [vmem:[#allocation5 + $0x340] sm:$0xff]
    %v206 = vld [vmem:[#allocation5 + $0x348] sm:$0xff]
    %v207 = vld [vmem:[#allocation5 + $0x350] sm:$0xff]
    %v208 = vld [vmem:[#allocation5 + $0x358] sm:$0xff]
    %v209 = vld [vmem:[#allocation5 + $0x360] sm:$0xff]
    %v210 = vld [vmem:[#allocation5 + $0x368] sm:$0xff]
    %v211 = vld [vmem:[#allocation5 + $0x370] sm:$0xff]
    %v212 = vld [vmem:[#allocation5 + $0x378] sm:$0xff]
    %v213 = vld [vmem:[#allocation5 + $0x380] sm:$0xff]
    %v214 = vld [vmem:[#allocation5 + $0x388] sm:$0xff]
    %v215 = vld [vmem:[#allocation5 + $0x390] sm:$0xff]
    %v216 = vld [vmem:[#allocation5 + $0x398] sm:$0xff]
    %v217 = vld [vmem:[#allocation5 + $0x3a0] sm:$0xff]
    %v218 = vld [vmem:[#allocation5 + $0x3a8] sm:$0xff]
    %v219 = vld [vmem:[#allocation5 + $0x3b0] sm:$0xff]
    %v220 = vld [vmem:[#allocation5 + $0x3b8] sm:$0xff]
    %v221 = vld [vmem:[#allocation5 + $0x3c0] sm:$0xff]
    %v222 = vld [vmem:[#allocation5 + $0x3c8] sm:$0xff]
    %v223 = vld [vmem:[#allocation5 + $0x3d0] sm:$0xff]
    %v224 = vld [vmem:[#allocation5 + $0x3d8] sm:$0xff]
    %v225 = vld [vmem:[#allocation5 + $0x3e0] sm:$0xff]
    %v226 = vld [vmem:[#allocation5 + $0x3e8] sm:$0xff]
    %v227 = vld [vmem:[#allocation5 + $0x3f0] sm:$0xff]
    %v228 = vld [vmem:[#allocation5 + $0x3f8] sm:$0xff]
    %v229 = vld [vmem:[#allocation7] sm:$0xf]
    %v231 = vperm.slane %v229, 0
    %v232 = vperm.slane %v229, 1
    %v233 = vperm.slane %v229, 2
    %v234 = vperm.slane %v229, 3
    %239 = vmatpush.msra.mxu0 %v161
    %240 = vmatpush.msra.mxu0 %v157
    %241 = vmatpush.msra.mxu0 %v153
    %242 = vmatpush.msra.mxu0 %v149
    %243 = vmatpush.msra.mxu0 %v145
    %244 = vmatpush.msra.mxu0 %v141
    %245 = vmatpush.msra.mxu0 %v137
    %246 = vmatpush.msra.mxu0 %v133
    %247 = vmatpush.msra.mxu0 %v129
    %248 = vmatpush.msra.mxu0 %v125
    %249 = vmatpush.msra.mxu0 %v121
    %250 = vmatpush.msra.mxu0 %v117
    %251 = vmatpush.msra.mxu0 %v113
    %252 = vmatpush.msra.mxu0 %v109
    %253 = vmatpush.msra.mxu0 %v105
    %254 = vmatpush.msra.mxu0 %v101
    %255 = vmatmul.f32.gmra.mxu0 %v99
    %v256 = vpop.f32.mrf.mxu0
    %v257 = vadd.f32 %v231, %v256
    %258 = vdwg.mxu0
    %259 = vmatpush.msra.mxu0 %v225
    %260 = vmatpush.msra.mxu0 %v221
    %261 = vmatpush.msra.mxu0 %v217
    %262 = vmatpush.msra.mxu0 %v213
    %263 = vmatpush.msra.mxu0 %v209
    %264 = vmatpush.msra.mxu0 %v205
    %265 = vmatpush.msra.mxu0 %v201
    %266 = vmatpush.msra.mxu0 %v197
    %267 = vmatpush.msra.mxu0 %v193
    %268 = vmatpush.msra.mxu0 %v189
    %269 = vmatpush.msra.mxu0 %v185
    %270 = vmatpush.msra.mxu0 %v181
    %271 = vmatpush.msra.mxu0 %v177
    %272 = vmatpush.msra.mxu0 %v173
    %273 = vmatpush.msra.mxu0 %v169
    %274 = vmatpush.msra.mxu0 %v165
    %275 = vmatmul.f32.gmra.mxu0 %v100
    %v276 = vpop.f32.mrf.mxu0
    %v277 = vadd.f32 %v257, %v276
    %278 = vdwg.mxu0
    %279 = vmatpush.msra.mxu0 %v162
    %280 = vmatpush.msra.mxu0 %v158
    %281 = vmatpush.msra.mxu0 %v154
    %282 = vmatpush.msra.mxu0 %v150
    %283 = vmatpush.msra.mxu0 %v146
    %284 = vmatpush.msra.mxu0 %v142
    %285 = vmatpush.msra.mxu0 %v138
    %286 = vmatpush.msra.mxu0 %v134
    %287 = vmatpush.msra.mxu0 %v130
    %288 = vmatpush.msra.mxu0 %v126
    %289 = vmatpush.msra.mxu0 %v122
    %290 = vmatpush.msra.mxu0 %v118
    %291 = vmatpush.msra.mxu0 %v114
    %292 = vmatpush.msra.mxu0 %v110
    %293 = vmatpush.msra.mxu0 %v106
    %294 = vmatpush.msra.mxu0 %v102
    %295 = vmatmul.f32.gmra.mxu0 %v99
    %v296 = vpop.f32.mrf.mxu0
    %v297 = vadd.f32 %v232, %v296
    %298 = vdwg.mxu0
    %299 = vmatpush.msra.mxu0 %v226
    %300 = vmatpush.msra.mxu0 %v222
    %301 = vmatpush.msra.mxu0 %v218
    %302 = vmatpush.msra.mxu0 %v214
    %303 = vmatpush.msra.mxu0 %v210
    %304 = vmatpush.msra.mxu0 %v206
    %305 = vmatpush.msra.mxu0 %v202
    %306 = vmatpush.msra.mxu0 %v198
    %307 = vmatpush.msra.mxu0 %v194
    %308 = vmatpush.msra.mxu0 %v190
    %309 = vmatpush.msra.mxu0 %v186
    %310 = vmatpush.msra.mxu0 %v182
    %311 = vmatpush.msra.mxu0 %v178
    %312 = vmatpush.msra.mxu0 %v174
    %313 = vmatpush.msra.mxu0 %v170
    %314 = vmatpush.msra.mxu0 %v166
    %315 = vmatmul.f32.gmra.mxu0 %v100
    %v316 = vpop.f32.mrf.mxu0
    %v317 = vadd.f32 %v297, %v316
    %318 = vdwg.mxu0
    %319 = vmatpush.msra.mxu0 %v163
    %320 = vmatpush.msra.mxu0 %v159
    %321 = vmatpush.msra.mxu0 %v155
    %322 = vmatpush.msra.mxu0 %v151
    %323 = vmatpush.msra.mxu0 %v147
    %324 = vmatpush.msra.mxu0 %v143
    %325 = vmatpush.msra.mxu0 %v139
    %326 = vmatpush.msra.mxu0 %v135
    %327 = vmatpush.msra.mxu0 %v131
    %328 = vmatpush.msra.mxu0 %v127
    %329 = vmatpush.msra.mxu0 %v123
    %330 = vmatpush.msra.mxu0 %v119
    %331 = vmatpush.msra.mxu0 %v115
    %332 = vmatpush.msra.mxu0 %v111
    %333 = vmatpush.msra.mxu0 %v107
    %334 = vmatpush.msra.mxu0 %v103
    %335 = vmatmul.f32.gmra.mxu0 %v99
    %v336 = vpop.f32.mrf.mxu0
    %v337 = vadd.f32 %v233, %v336
    %338 = vdwg.mxu0
    %339 = vmatpush.msra.mxu0 %v227
    %340 = vmatpush.msra.mxu0 %v223
    %341 = vmatpush.msra.mxu0 %v219
    %342 = vmatpush.msra.mxu0 %v215
    %343 = vmatpush.msra.mxu0 %v211
    %344 = vmatpush.msra.mxu0 %v207
    %345 = vmatpush.msra.mxu0 %v203
    %346 = vmatpush.msra.mxu0 %v199
    %347 = vmatpush.msra.mxu0 %v195
    %348 = vmatpush.msra.mxu0 %v191
    %349 = vmatpush.msra.mxu0 %v187
    %350 = vmatpush.msra.mxu0 %v183
    %351 = vmatpush.msra.mxu0 %v179
    %352 = vmatpush.msra.mxu0 %v175
    %353 = vmatpush.msra.mxu0 %v171
    %354 = vmatpush.msra.mxu0 %v167
    %355 = vmatmul.f32.gmra.mxu0 %v100
    %v356 = vpop.f32.mrf.mxu0
    %v357 = vadd.f32 %v337, %v356
    %358 = vdwg.mxu0
    %359 = vmatpush.msra.mxu0 %v164
    %360 = vmatpush.msra.mxu0 %v160
    %361 = vmatpush.msra.mxu0 %v156
    %362 = vmatpush.msra.mxu0 %v152
    %363 = vmatpush.msra.mxu0 %v148
    %364 = vmatpush.msra.mxu0 %v144
    %365 = vmatpush.msra.mxu0 %v140
    %366 = vmatpush.msra.mxu0 %v136
    %367 = vmatpush.msra.mxu0 %v132
    %368 = vmatpush.msra.mxu0 %v128
    %369 = vmatpush.msra.mxu0 %v124
    %370 = vmatpush.msra.mxu0 %v120
    %371 = vmatpush.msra.mxu0 %v116
    %372 = vmatpush.msra.mxu0 %v112
    %373 = vmatpush.msra.mxu0 %v108
    %374 = vmatpush.msra.mxu0 %v104
    %375 = vmatmul.f32.gmra.mxu0 %v99
    %v376 = vpop.f32.mrf.mxu0
    %v377 = vadd.f32 %v234, %v376
    %378 = vdwg.mxu0
    %379 = vmatpush.msra.mxu0 %v228
    %380 = vmatpush.msra.mxu0 %v224
    %381 = vmatpush.msra.mxu0 %v220
    %382 = vmatpush.msra.mxu0 %v216
    %383 = vmatpush.msra.mxu0 %v212
    %384 = vmatpush.msra.mxu0 %v208
    %385 = vmatpush.msra.mxu0 %v204
    %386 = vmatpush.msra.mxu0 %v200
    %387 = vmatpush.msra.mxu0 %v196
    %388 = vmatpush.msra.mxu0 %v192
    %389 = vmatpush.msra.mxu0 %v188
    %390 = vmatpush.msra.mxu0 %v184
    %391 = vmatpush.msra.mxu0 %v180
    %392 = vmatpush.msra.mxu0 %v176
    %393 = vmatpush.msra.mxu0 %v172
    %394 = vmatpush.msra.mxu0 %v168
    %395 = vmatmul.f32.gmra.mxu0 %v100
    %v396 = vpop.f32.mrf.mxu0
    %v397 = vadd.f32 %v377, %v396
    %398 = vdwg.mxu0
    %v399 = vmul.f32 %v277, 0.5
    %v400 = vmul.f32 %v317, 0.5
    %v401 = vmul.f32 %v357, 0.5
    %v402 = vmul.f32 %v397, 0.5
    %v403 = vmul.f32 %v277, 0.70710677
    %v404 = vmul.f32 %v317, 0.70710677
    %v405 = vmul.f32 %v357, 0.70710677
    %v406 = vmul.f32 %v397, 0.70710677
    %v407 = vand.u32 2147483647, %v403
    %v408 = vand.u32 2147483647, %v404
    %v409 = vand.u32 2147483647, %v405
    %v410 = vand.u32 2147483647, %v406
    %v411 = vmul.f32 %v407, 0.3275911
    %v412 = vmul.f32 %v408, 0.3275911
    %v413 = vmul.f32 %v409, 0.3275911
    %v414 = vmul.f32 %v410, 0.3275911
    %v415 = vadd.f32 %v411, 1.0
    %v416 = vadd.f32 %v412, 1.0
    %v417 = vadd.f32 %v413, 1.0
    %v418 = vadd.f32 %v414, 1.0
    %v419 = vrcp.pop %v415
    %v420 = vmul.f32 %v415, %v419
    %v421 = vsub.f32 1.0, %v420
    %v422 = vmul.f32 %v419, %v421
    %v423 = vadd.f32 %v419, %v422
    %vm424 = vweird.f32 %v415
    %vm425 = vweird.f32 %v419
    %vm426 = vmor %vm424, %vm425
    %v427 = vsel %vm426, %v419, %v423
    %v428 = vand.u32 2147483647, %v415
    %vm429 = vcmp.eq.f32.partialorder %v428, 8.507059e+37
    %v430 = vand.u32 %v415, 2147483648
    %v431 = vor.u32 1.1754944e-38, %v430
    %v432 = vsel %vm429, %v431, %v427
    %v433 = vmul.f32 1.0, %v432
    %v434 = vrcp.pop %v416
    %v435 = vmul.f32 %v416, %v434
    %v436 = vsub.f32 1.0, %v435
    %v437 = vmul.f32 %v434, %v436
    %v438 = vadd.f32 %v434, %v437
    %vm439 = vweird.f32 %v416
    %vm440 = vweird.f32 %v434
    %vm441 = vmor %vm439, %vm440
    %v442 = vsel %vm441, %v434, %v438
    %v443 = vand.u32 2147483647, %v416
    %vm444 = vcmp.eq.f32.partialorder %v443, 8.507059e+37
    %v445 = vand.u32 %v416, 2147483648
    %v446 = vor.u32 1.1754944e-38, %v445
    %v447 = vsel %vm444, %v446, %v442
    %v448 = vmul.f32 1.0, %v447
    %v449 = vrcp.pop %v417
    %v450 = vmul.f32 %v417, %v449
    %v451 = vsub.f32 1.0, %v450
    %v452 = vmul.f32 %v449, %v451
    %v453 = vadd.f32 %v449, %v452
    %vm454 = vweird.f32 %v417
    %vm455 = vweird.f32 %v449
    %vm456 = vmor %vm454, %vm455
    %v457 = vsel %vm456, %v449, %v453
    %v458 = vand.u32 2147483647, %v417
    %vm459 = vcmp.eq.f32.partialorder %v458, 8.507059e+37
    %v460 = vand.u32 %v417, 2147483648
    %v461 = vor.u32 1.1754944e-38, %v460
    %v462 = vsel %vm459, %v461, %v457
    %v463 = vmul.f32 1.0, %v462
    %v464 = vrcp.pop %v418
    %v465 = vmul.f32 %v418, %v464
    %v466 = vsub.f32 1.0, %v465
    %v467 = vmul.f32 %v464, %v466
    %v468 = vadd.f32 %v464, %v467
    %vm469 = vweird.f32 %v418
    %vm470 = vweird.f32 %v464
    %vm471 = vmor %vm469, %vm470
    %v472 = vsel %vm471, %v464, %v468
    %v473 = vand.u32 2147483647, %v418
    %vm474 = vcmp.eq.f32.partialorder %v473, 8.507059e+37
    %v475 = vand.u32 %v418, 2147483648
    %v476 = vor.u32 1.1754944e-38, %v475
    %v477 = vsel %vm474, %v476, %v472
    %v478 = vmul.f32 1.0, %v477
    %v479 = vmul.f32 %v433, 1.0614054
    %v480 = vmul.f32 %v448, 1.0614054
    %v481 = vmul.f32 %v463, 1.0614054
    %v482 = vmul.f32 %v478, 1.0614054
    %v483 = vadd.f32 %v479, -1.4531521
    %v484 = vadd.f32 %v480, -1.4531521
    %v485 = vadd.f32 %v481, -1.4531521
    %v486 = vadd.f32 %v482, -1.4531521
    %v487 = vmul.f32 %v483, %v433
    %v488 = vmul.f32 %v484, %v448
    %v489 = vmul.f32 %v485, %v463
    %v490 = vmul.f32 %v486, %v478
    %v491 = vadd.f32 %v487, 1.4214138
    %v492 = vadd.f32 %v488, 1.4214138
    %v493 = vadd.f32 %v489, 1.4214138
    %v494 = vadd.f32 %v490, 1.4214138
    %v495 = vmul.f32 %v491, %v433
    %v496 = vmul.f32 %v492, %v448
    %v497 = vmul.f32 %v493, %v463
    %v498 = vmul.f32 %v494, %v478
    %v499 = vadd.f32 %v495, -0.28449672
    %v500 = vadd.f32 %v496, -0.28449672
    %v501 = vadd.f32 %v497, -0.28449672
    %v502 = vadd.f32 %v498, -0.28449672
    %v503 = vmul.f32 %v499, %v433
    %v504 = vmul.f32 %v500, %v448
    %v505 = vmul.f32 %v501, %v463
    %v506 = vmul.f32 %v502, %v478
    %v507 = vadd.f32 %v503, 0.2548296
    %v508 = vadd.f32 %v504, 0.2548296
    %v509 = vadd.f32 %v505, 0.2548296
    %v510 = vadd.f32 %v506, 0.2548296
    %v511 = vmul.f32 %v507, %v433
    %v512 = vmul.f32 %v508, %v448
    %v513 = vmul.f32 %v509, %v463
    %v514 = vmul.f32 %v510, %v478
    %v515 = vsub.f32 0.0, %v407
    %v516 = vsub.f32 0.0, %v408
    %v517 = vsub.f32 0.0, %v409
    %v518 = vsub.f32 0.0, %v410
    %v519 = vmul.f32 %v515, %v407
    %v520 = vmul.f32 %v516, %v408
    %v521 = vmul.f32 %v517, %v409
    %v522 = vmul.f32 %v518, %v410
    %v523 = vmul.f32 %v519, 1.442695
    %v524 = vpow.pop %v523
    %v525 = vmul.f32 %v520, 1.442695
    %v526 = vpow.pop %v525
    %v527 = vmul.f32 %v521, 1.442695
    %v528 = vpow.pop %v527
    %v529 = vmul.f32 %v522, 1.442695
    %v530 = vpow.pop %v529
    %v531 = vmul.f32 %v511, %v524
    %v532 = vmul.f32 %v512, %v526
    %v533 = vmul.f32 %v513, %v528
    %v534 = vmul.f32 %v514, %v530
    %v535 = vsub.f32 1.0, %v531
    %v536 = vsub.f32 1.0, %v532
    %v537 = vsub.f32 1.0, %v533
    %v538 = vsub.f32 1.0, %v534
    %vm539 = vcmp.lt.f32.partialorder %v403, 0.0
    %vm540 = vcmp.lt.f32.partialorder %v404, 0.0
    %vm541 = vcmp.lt.f32.partialorder %v405, 0.0
    %vm542 = vcmp.lt.f32.partialorder %v406, 0.0
    %v543 = vsub.f32 0.0, %v535
    %v544 = vsub.f32 0.0, %v536
    %v545 = vsub.f32 0.0, %v537
    %v546 = vsub.f32 0.0, %v538
    %v547 = vsel %vm539, %v543, %v535
    %v548 = vsel %vm540, %v544, %v536
    %v549 = vsel %vm541, %v545, %v537
    %v550 = vsel %vm542, %v546, %v538
    %v551 = vadd.f32 %v547, 1.0
    %v552 = vadd.f32 %v548, 1.0
    %v553 = vadd.f32 %v549, 1.0
    %v554 = vadd.f32 %v550, 1.0
    %v555 = vmul.f32 %v399, %v551
    %v556 = vmul.f32 %v400, %v552
    %v557 = vmul.f32 %v401, %v553
    %v558 = vmul.f32 %v402, %v554
    %v559 = vld [vmem:[#allocation8] sm:$0xff]
    %v560 = vld [vmem:[#allocation8 + $0x8] sm:$0xff]
    %v561 = vld [vmem:[#allocation8 + $0x10] sm:$0xff]
    %v562 = vld [vmem:[#allocation8 + $0x18] sm:$0xff]
    %v563 = vld [vmem:[#allocation8 + $0x20] sm:$0xff]
    %v564 = vld [vmem:[#allocation8 + $0x28] sm:$0xff]
    %v565 = vld [vmem:[#allocation8 + $0x30] sm:$0xff]
    %v566 = vld [vmem:[#allocation8 + $0x38] sm:$0xff]
    %v567 = vld [vmem:[#allocation8 + $0x40] sm:$0xff]
    %v568 = vld [vmem:[#allocation8 + $0x48] sm:$0xff]
    %v569 = vld [vmem:[#allocation8 + $0x50] sm:$0xff]
    %v570 = vld [vmem:[#allocation8 + $0x58] sm:$0xff]
    %v571 = vld [vmem:[#allocation8 + $0x60] sm:$0xff]
    %v572 = vld [vmem:[#allocation8 + $0x68] sm:$0xff]
    %v573 = vld [vmem:[#allocation8 + $0x70] sm:$0xff]
    %v574 = vld [vmem:[#allocation8 + $0x78] sm:$0xff]
    %v575 = vld [vmem:[#allocation8 + $0x80] sm:$0xff]
    %v576 = vld [vmem:[#allocation8 + $0x88] sm:$0xff]
    %v577 = vld [vmem:[#allocation8 + $0x90] sm:$0xff]
    %v578 = vld [vmem:[#allocation8 + $0x98] sm:$0xff]
    %v579 = vld [vmem:[#allocation8 + $0xa0] sm:$0xff]
    %v580 = vld [vmem:[#allocation8 + $0xa8] sm:$0xff]
    %v581 = vld [vmem:[#allocation8 + $0xb0] sm:$0xff]
    %v582 = vld [vmem:[#allocation8 + $0xb8] sm:$0xff]
    %v583 = vld [vmem:[#allocation8 + $0xc0] sm:$0xff]
    %v584 = vld [vmem:[#allocation8 + $0xc8] sm:$0xff]
    %v585 = vld [vmem:[#allocation8 + $0xd0] sm:$0xff]
    %v586 = vld [vmem:[#allocation8 + $0xd8] sm:$0xff]
    %v587 = vld [vmem:[#allocation8 + $0xe0] sm:$0xff]
    %v588 = vld [vmem:[#allocation8 + $0xe8] sm:$0xff]
    %v589 = vld [vmem:[#allocation8 + $0xf0] sm:$0xff]
    %v590 = vld [vmem:[#allocation8 + $0xf8] sm:$0xff]
    %v591 = vld [vmem:[#allocation8 + $0x100] sm:$0xff]
    %v592 = vld [vmem:[#allocation8 + $0x108] sm:$0xff]
    %v593 = vld [vmem:[#allocation8 + $0x110] sm:$0xff]
    %v594 = vld [vmem:[#allocation8 + $0x118] sm:$0xff]
    %v595 = vld [vmem:[#allocation8 + $0x120] sm:$0xff]
    %v596 = vld [vmem:[#allocation8 + $0x128] sm:$0xff]
    %v597 = vld [vmem:[#allocation8 + $0x130] sm:$0xff]
    %v598 = vld [vmem:[#allocation8 + $0x138] sm:$0xff]
    %v599 = vld [vmem:[#allocation8 + $0x140] sm:$0xff]
    %v600 = vld [vmem:[#allocation8 + $0x148] sm:$0xff]
    %v601 = vld [vmem:[#allocation8 + $0x150] sm:$0xff]
    %v602 = vld [vmem:[#allocation8 + $0x158] sm:$0xff]
    %v603 = vld [vmem:[#allocation8 + $0x160] sm:$0xff]
    %v604 = vld [vmem:[#allocation8 + $0x168] sm:$0xff]
    %v605 = vld [vmem:[#allocation8 + $0x170] sm:$0xff]
    %v606 = vld [vmem:[#allocation8 + $0x178] sm:$0xff]
    %v607 = vld [vmem:[#allocation8 + $0x180] sm:$0xff]
    %v608 = vld [vmem:[#allocation8 + $0x188] sm:$0xff]
    %v609 = vld [vmem:[#allocation8 + $0x190] sm:$0xff]
    %v610 = vld [vmem:[#allocation8 + $0x198] sm:$0xff]
    %v611 = vld [vmem:[#allocation8 + $0x1a0] sm:$0xff]
    %v612 = vld [vmem:[#allocation8 + $0x1a8] sm:$0xff]
    %v613 = vld [vmem:[#allocation8 + $0x1b0] sm:$0xff]
    %v614 = vld [vmem:[#allocation8 + $0x1b8] sm:$0xff]
    %v615 = vld [vmem:[#allocation8 + $0x1c0] sm:$0xff]
    %v616 = vld [vmem:[#allocation8 + $0x1c8] sm:$0xff]
    %v617 = vld [vmem:[#allocation8 + $0x1d0] sm:$0xff]
    %v618 = vld [vmem:[#allocation8 + $0x1d8] sm:$0xff]
    %v619 = vld [vmem:[#allocation8 + $0x1e0] sm:$0xff]
    %v620 = vld [vmem:[#allocation8 + $0x1e8] sm:$0xff]
    %v621 = vld [vmem:[#allocation8 + $0x1f0] sm:$0xff]
    %v622 = vld [vmem:[#allocation8 + $0x1f8] sm:$0xff]
    %v623 = vld [vmem:[#allocation8 + $0x200] sm:$0xff]
    %v624 = vld [vmem:[#allocation8 + $0x208] sm:$0xff]
    %v625 = vld [vmem:[#allocation8 + $0x210] sm:$0xff]
    %v626 = vld [vmem:[#allocation8 + $0x218] sm:$0xff]
    %v627 = vld [vmem:[#allocation8 + $0x220] sm:$0xff]
    %v628 = vld [vmem:[#allocation8 + $0x228] sm:$0xff]
    %v629 = vld [vmem:[#allocation8 + $0x230] sm:$0xff]
    %v630 = vld [vmem:[#allocation8 + $0x238] sm:$0xff]
    %v631 = vld [vmem:[#allocation8 + $0x240] sm:$0xff]
    %v632 = vld [vmem:[#allocation8 + $0x248] sm:$0xff]
    %v633 = vld [vmem:[#allocation8 + $0x250] sm:$0xff]
    %v634 = vld [vmem:[#allocation8 + $0x258] sm:$0xff]
    %v635 = vld [vmem:[#allocation8 + $0x260] sm:$0xff]
    %v636 = vld [vmem:[#allocation8 + $0x268] sm:$0xff]
    %v637 = vld [vmem:[#allocation8 + $0x270] sm:$0xff]
    %v638 = vld [vmem:[#allocation8 + $0x278] sm:$0xff]
    %v639 = vld [vmem:[#allocation8 + $0x280] sm:$0xff]
    %v640 = vld [vmem:[#allocation8 + $0x288] sm:$0xff]
    %v641 = vld [vmem:[#allocation8 + $0x290] sm:$0xff]
    %v642 = vld [vmem:[#allocation8 + $0x298] sm:$0xff]
    %v643 = vld [vmem:[#allocation8 + $0x2a0] sm:$0xff]
    %v644 = vld [vmem:[#allocation8 + $0x2a8] sm:$0xff]
    %v645 = vld [vmem:[#allocation8 + $0x2b0] sm:$0xff]
    %v646 = vld [vmem:[#allocation8 + $0x2b8] sm:$0xff]
    %v647 = vld [vmem:[#allocation8 + $0x2c0] sm:$0xff]
    %v648 = vld [vmem:[#allocation8 + $0x2c8] sm:$0xff]
    %v649 = vld [vmem:[#allocation8 + $0x2d0] sm:$0xff]
    %v650 = vld [vmem:[#allocation8 + $0x2d8] sm:$0xff]
    %v651 = vld [vmem:[#allocation8 + $0x2e0] sm:$0xff]
    %v652 = vld [vmem:[#allocation8 + $0x2e8] sm:$0xff]
    %v653 = vld [vmem:[#allocation8 + $0x2f0] sm:$0xff]
    %v654 = vld [vmem:[#allocation8 + $0x2f8] sm:$0xff]
    %v655 = vld [vmem:[#allocation8 + $0x300] sm:$0xff]
    %v656 = vld [vmem:[#allocation8 + $0x308] sm:$0xff]
    %v657 = vld [vmem:[#allocation8 + $0x310] sm:$0xff]
    %v658 = vld [vmem:[#allocation8 + $0x318] sm:$0xff]
    %v659 = vld [vmem:[#allocation8 + $0x320] sm:$0xff]
    %v660 = vld [vmem:[#allocation8 + $0x328] sm:$0xff]
    %v661 = vld [vmem:[#allocation8 + $0x330] sm:$0xff]
    %v662 = vld [vmem:[#allocation8 + $0x338] sm:$0xff]
    %v663 = vld [vmem:[#allocation8 + $0x340] sm:$0xff]
    %v664 = vld [vmem:[#allocation8 + $0x348] sm:$0xff]
    %v665 = vld [vmem:[#allocation8 + $0x350] sm:$0xff]
    %v666 = vld [vmem:[#allocation8 + $0x358] sm:$0xff]
    %v667 = vld [vmem:[#allocation8 + $0x360] sm:$0xff]
    %v668 = vld [vmem:[#allocation8 + $0x368] sm:$0xff]
    %v669 = vld [vmem:[#allocation8 + $0x370] sm:$0xff]
    %v670 = vld [vmem:[#allocation8 + $0x378] sm:$0xff]
    %v671 = vld [vmem:[#allocation8 + $0x380] sm:$0xff]
    %v672 = vld [vmem:[#allocation8 + $0x388] sm:$0xff]
    %v673 = vld [vmem:[#allocation8 + $0x390] sm:$0xff]
    %v674 = vld [vmem:[#allocation8 + $0x398] sm:$0xff]
    %v675 = vld [vmem:[#allocation8 + $0x3a0] sm:$0xff]
    %v676 = vld [vmem:[#allocation8 + $0x3a8] sm:$0xff]
    %v677 = vld [vmem:[#allocation8 + $0x3b0] sm:$0xff]
    %v678 = vld [vmem:[#allocation8 + $0x3b8] sm:$0xff]
    %v679 = vld [vmem:[#allocation8 + $0x3c0] sm:$0xff]
    %v680 = vld [vmem:[#allocation8 + $0x3c8] sm:$0xff]
    %v681 = vld [vmem:[#allocation8 + $0x3d0] sm:$0xff]
    %v682 = vld [vmem:[#allocation8 + $0x3d8] sm:$0xff]
    %v683 = vld [vmem:[#allocation8 + $0x3e0] sm:$0xff]
    %v684 = vld [vmem:[#allocation8 + $0x3e8] sm:$0xff]
    %v685 = vld [vmem:[#allocation8 + $0x3f0] sm:$0xff]
    %v686 = vld [vmem:[#allocation8 + $0x3f8] sm:$0xff]
    %v687 = vld [vmem:[#allocation8 + $0x400] sm:$0xff]
    %v688 = vld [vmem:[#allocation8 + $0x408] sm:$0xff]
    %v689 = vld [vmem:[#allocation8 + $0x410] sm:$0xff]
    %v690 = vld [vmem:[#allocation8 + $0x418] sm:$0xff]
    %v691 = vld [vmem:[#allocation8 + $0x420] sm:$0xff]
    %v692 = vld [vmem:[#allocation8 + $0x428] sm:$0xff]
    %v693 = vld [vmem:[#allocation8 + $0x430] sm:$0xff]
    %v694 = vld [vmem:[#allocation8 + $0x438] sm:$0xff]
    %v695 = vld [vmem:[#allocation8 + $0x440] sm:$0xff]
    %v696 = vld [vmem:[#allocation8 + $0x448] sm:$0xff]
    %v697 = vld [vmem:[#allocation8 + $0x450] sm:$0xff]
    %v698 = vld [vmem:[#allocation8 + $0x458] sm:$0xff]
    %v699 = vld [vmem:[#allocation8 + $0x460] sm:$0xff]
    %v700 = vld [vmem:[#allocation8 + $0x468] sm:$0xff]
    %v701 = vld [vmem:[#allocation8 + $0x470] sm:$0xff]
    %v702 = vld [vmem:[#allocation8 + $0x478] sm:$0xff]
    %v703 = vld [vmem:[#allocation8 + $0x480] sm:$0xff]
    %v704 = vld [vmem:[#allocation8 + $0x488] sm:$0xff]
    %v705 = vld [vmem:[#allocation8 + $0x490] sm:$0xff]
    %v706 = vld [vmem:[#allocation8 + $0x498] sm:$0xff]
    %v707 = vld [vmem:[#allocation8 + $0x4a0] sm:$0xff]
    %v708 = vld [vmem:[#allocation8 + $0x4a8] sm:$0xff]
    %v709 = vld [vmem:[#allocation8 + $0x4b0] sm:$0xff]
    %v710 = vld [vmem:[#allocation8 + $0x4b8] sm:$0xff]
    %v711 = vld [vmem:[#allocation8 + $0x4c0] sm:$0xff]
    %v712 = vld [vmem:[#allocation8 + $0x4c8] sm:$0xff]
    %v713 = vld [vmem:[#allocation8 + $0x4d0] sm:$0xff]
    %v714 = vld [vmem:[#allocation8 + $0x4d8] sm:$0xff]
    %v715 = vld [vmem:[#allocation8 + $0x4e0] sm:$0xff]
    %v716 = vld [vmem:[#allocation8 + $0x4e8] sm:$0xff]
    %v717 = vld [vmem:[#allocation8 + $0x4f0] sm:$0xff]
    %v718 = vld [vmem:[#allocation8 + $0x4f8] sm:$0xff]
    %v719 = vld [vmem:[#allocation8 + $0x500] sm:$0xff]
    %v720 = vld [vmem:[#allocation8 + $0x508] sm:$0xff]
    %v721 = vld [vmem:[#allocation8 + $0x510] sm:$0xff]
    %v722 = vld [vmem:[#allocation8 + $0x518] sm:$0xff]
    %v723 = vld [vmem:[#allocation8 + $0x520] sm:$0xff]
    %v724 = vld [vmem:[#allocation8 + $0x528] sm:$0xff]
    %v725 = vld [vmem:[#allocation8 + $0x530] sm:$0xff]
    %v726 = vld [vmem:[#allocation8 + $0x538] sm:$0xff]
    %v727 = vld [vmem:[#allocation8 + $0x540] sm:$0xff]
    %v728 = vld [vmem:[#allocation8 + $0x548] sm:$0xff]
    %v729 = vld [vmem:[#allocation8 + $0x550] sm:$0xff]
    %v730 = vld [vmem:[#allocation8 + $0x558] sm:$0xff]
    %v731 = vld [vmem:[#allocation8 + $0x560] sm:$0xff]
    %v732 = vld [vmem:[#allocation8 + $0x568] sm:$0xff]
    %v733 = vld [vmem:[#allocation8 + $0x570] sm:$0xff]
    %v734 = vld [vmem:[#allocation8 + $0x578] sm:$0xff]
    %v735 = vld [vmem:[#allocation8 + $0x580] sm:$0xff]
    %v736 = vld [vmem:[#allocation8 + $0x588] sm:$0xff]
    %v737 = vld [vmem:[#allocation8 + $0x590] sm:$0xff]
    %v738 = vld [vmem:[#allocation8 + $0x598] sm:$0xff]
    %v739 = vld [vmem:[#allocation8 + $0x5a0] sm:$0xff]
    %v740 = vld [vmem:[#allocation8 + $0x5a8] sm:$0xff]
    %v741 = vld [vmem:[#allocation8 + $0x5b0] sm:$0xff]
    %v742 = vld [vmem:[#allocation8 + $0x5b8] sm:$0xff]
    %v743 = vld [vmem:[#allocation8 + $0x5c0] sm:$0xff]
    %v744 = vld [vmem:[#allocation8 + $0x5c8] sm:$0xff]
    %v745 = vld [vmem:[#allocation8 + $0x5d0] sm:$0xff]
    %v746 = vld [vmem:[#allocation8 + $0x5d8] sm:$0xff]
    %v747 = vld [vmem:[#allocation8 + $0x5e0] sm:$0xff]
    %v748 = vld [vmem:[#allocation8 + $0x5e8] sm:$0xff]
    %v749 = vld [vmem:[#allocation8 + $0x5f0] sm:$0xff]
    %v750 = vld [vmem:[#allocation8 + $0x5f8] sm:$0xff]
    %v751 = vld [vmem:[#allocation8 + $0x600] sm:$0xff]
    %v752 = vld [vmem:[#allocation8 + $0x608] sm:$0xff]
    %v753 = vld [vmem:[#allocation8 + $0x610] sm:$0xff]
    %v754 = vld [vmem:[#allocation8 + $0x618] sm:$0xff]
    %v755 = vld [vmem:[#allocation8 + $0x620] sm:$0xff]
    %v756 = vld [vmem:[#allocation8 + $0x628] sm:$0xff]
    %v757 = vld [vmem:[#allocation8 + $0x630] sm:$0xff]
    %v758 = vld [vmem:[#allocation8 + $0x638] sm:$0xff]
    %v759 = vld [vmem:[#allocation8 + $0x640] sm:$0xff]
    %v760 = vld [vmem:[#allocation8 + $0x648] sm:$0xff]
    %v761 = vld [vmem:[#allocation8 + $0x650] sm:$0xff]
    %v762 = vld [vmem:[#allocation8 + $0x658] sm:$0xff]
    %v763 = vld [vmem:[#allocation8 + $0x660] sm:$0xff]
    %v764 = vld [vmem:[#allocation8 + $0x668] sm:$0xff]
    %v765 = vld [vmem:[#allocation8 + $0x670] sm:$0xff]
    %v766 = vld [vmem:[#allocation8 + $0x678] sm:$0xff]
    %v767 = vld [vmem:[#allocation8 + $0x680] sm:$0xff]
    %v768 = vld [vmem:[#allocation8 + $0x688] sm:$0xff]
    %v769 = vld [vmem:[#allocation8 + $0x690] sm:$0xff]
    %v770 = vld [vmem:[#allocation8 + $0x698] sm:$0xff]
    %v771 = vld [vmem:[#allocation8 + $0x6a0] sm:$0xff]
    %v772 = vld [vmem:[#allocation8 + $0x6a8] sm:$0xff]
    %v773 = vld [vmem:[#allocation8 + $0x6b0] sm:$0xff]
    %v774 = vld [vmem:[#allocation8 + $0x6b8] sm:$0xff]
    %v775 = vld [vmem:[#allocation8 + $0x6c0] sm:$0xff]
    %v776 = vld [vmem:[#allocation8 + $0x6c8] sm:$0xff]
    %v777 = vld [vmem:[#allocation8 + $0x6d0] sm:$0xff]
    %v778 = vld [vmem:[#allocation8 + $0x6d8] sm:$0xff]
    %v779 = vld [vmem:[#allocation8 + $0x6e0] sm:$0xff]
    %v780 = vld [vmem:[#allocation8 + $0x6e8] sm:$0xff]
    %v781 = vld [vmem:[#allocation8 + $0x6f0] sm:$0xff]
    %v782 = vld [vmem:[#allocation8 + $0x6f8] sm:$0xff]
    %v783 = vld [vmem:[#allocation8 + $0x700] sm:$0xff]
    %v784 = vld [vmem:[#allocation8 + $0x708] sm:$0xff]
    %v785 = vld [vmem:[#allocation8 + $0x710] sm:$0xff]
    %v786 = vld [vmem:[#allocation8 + $0x718] sm:$0xff]
    %v787 = vld [vmem:[#allocation8 + $0x720] sm:$0xff]
    %v788 = vld [vmem:[#allocation8 + $0x728] sm:$0xff]
    %v789 = vld [vmem:[#allocation8 + $0x730] sm:$0xff]
    %v790 = vld [vmem:[#allocation8 + $0x738] sm:$0xff]
    %v791 = vld [vmem:[#allocation8 + $0x740] sm:$0xff]
    %v792 = vld [vmem:[#allocation8 + $0x748] sm:$0xff]
    %v793 = vld [vmem:[#allocation8 + $0x750] sm:$0xff]
    %v794 = vld [vmem:[#allocation8 + $0x758] sm:$0xff]
    %v795 = vld [vmem:[#allocation8 + $0x760] sm:$0xff]
    %v796 = vld [vmem:[#allocation8 + $0x768] sm:$0xff]
    %v797 = vld [vmem:[#allocation8 + $0x770] sm:$0xff]
    %v798 = vld [vmem:[#allocation8 + $0x778] sm:$0xff]
    %v799 = vld [vmem:[#allocation8 + $0x780] sm:$0xff]
    %v800 = vld [vmem:[#allocation8 + $0x788] sm:$0xff]
    %v801 = vld [vmem:[#allocation8 + $0x790] sm:$0xff]
    %v802 = vld [vmem:[#allocation8 + $0x798] sm:$0xff]
    %v803 = vld [vmem:[#allocation8 + $0x7a0] sm:$0xff]
    %v804 = vld [vmem:[#allocation8 + $0x7a8] sm:$0xff]
    %v805 = vld [vmem:[#allocation8 + $0x7b0] sm:$0xff]
    %v806 = vld [vmem:[#allocation8 + $0x7b8] sm:$0xff]
    %v807 = vld [vmem:[#allocation8 + $0x7c0] sm:$0xff]
    %v808 = vld [vmem:[#allocation8 + $0x7c8] sm:$0xff]
    %v809 = vld [vmem:[#allocation8 + $0x7d0] sm:$0xff]
    %v810 = vld [vmem:[#allocation8 + $0x7d8] sm:$0xff]
    %v811 = vld [vmem:[#allocation8 + $0x7e0] sm:$0xff]
    %v812 = vld [vmem:[#allocation8 + $0x7e8] sm:$0xff]
    %v813 = vld [vmem:[#allocation8 + $0x7f0] sm:$0xff]
    %v814 = vld [vmem:[#allocation8 + $0x7f8] sm:$0xff]
    %v815 = vld [vmem:[#allocation10] sm:$0xf]
    %v817 = vperm.slane %v815, 0
    %v818 = vperm.slane %v815, 1
    %v819 = vperm.slane %v815, 2
    %v820 = vperm.slane %v815, 3
    %825 = vmatpush.msra.mxu0 %v619
    %826 = vmatpush.msra.mxu0 %v615
    %827 = vmatpush.msra.mxu0 %v611
    %828 = vmatpush.msra.mxu0 %v607
    %829 = vmatpush.msra.mxu0 %v603
    %830 = vmatpush.msra.mxu0 %v599
    %831 = vmatpush.msra.mxu0 %v595
    %832 = vmatpush.msra.mxu0 %v591
    %833 = vmatpush.msra.mxu0 %v587
    %834 = vmatpush.msra.mxu0 %v583
    %835 = vmatpush.msra.mxu0 %v579
    %836 = vmatpush.msra.mxu0 %v575
    %837 = vmatpush.msra.mxu0 %v571
    %838 = vmatpush.msra.mxu0 %v567
    %839 = vmatpush.msra.mxu0 %v563
    %840 = vmatpush.msra.mxu0 %v559
    %841 = vmatmul.f32.gmra.mxu0 %v555
    %v842 = vpop.f32.mrf.mxu0
    %v843 = vadd.f32 %v817, %v842
    %844 = vdwg.mxu0
    %845 = vmatpush.msra.mxu0 %v683
    %846 = vmatpush.msra.mxu0 %v679
    %847 = vmatpush.msra.mxu0 %v675
    %848 = vmatpush.msra.mxu0 %v671
    %849 = vmatpush.msra.mxu0 %v667
    %850 = vmatpush.msra.mxu0 %v663
    %851 = vmatpush.msra.mxu0 %v659
    %852 = vmatpush.msra.mxu0 %v655
    %853 = vmatpush.msra.mxu0 %v651
    %854 = vmatpush.msra.mxu0 %v647
    %855 = vmatpush.msra.mxu0 %v643
    %856 = vmatpush.msra.mxu0 %v639
    %857 = vmatpush.msra.mxu0 %v635
    %858 = vmatpush.msra.mxu0 %v631
    %859 = vmatpush.msra.mxu0 %v627
    %860 = vmatpush.msra.mxu0 %v623
    %861 = vmatmul.f32.gmra.mxu0 %v556
    %v862 = vpop.f32.mrf.mxu0
    %v863 = vadd.f32 %v843, %v862
    %864 = vdwg.mxu0
    %865 = vmatpush.msra.mxu0 %v747
    %866 = vmatpush.msra.mxu0 %v743
    %867 = vmatpush.msra.mxu0 %v739
    %868 = vmatpush.msra.mxu0 %v735
    %869 = vmatpush.msra.mxu0 %v731
    %870 = vmatpush.msra.mxu0 %v727
    %871 = vmatpush.msra.mxu0 %v723
    %872 = vmatpush.msra.mxu0 %v719
    %873 = vmatpush.msra.mxu0 %v715
    %874 = vmatpush.msra.mxu0 %v711
    %875 = vmatpush.msra.mxu0 %v707
    %876 = vmatpush.msra.mxu0 %v703
    %877 = vmatpush.msra.mxu0 %v699
    %878 = vmatpush.msra.mxu0 %v695
    %879 = vmatpush.msra.mxu0 %v691
    %880 = vmatpush.msra.mxu0 %v687
    %881 = vmatmul.f32.gmra.mxu0 %v557
    %v882 = vpop.f32.mrf.mxu0
    %v883 = vadd.f32 %v863, %v882
    %884 = vdwg.mxu0
    %885 = vmatpush.msra.mxu0 %v811
    %886 = vmatpush.msra.mxu0 %v807
    %887 = vmatpush.msra.mxu0 %v803
    %888 = vmatpush.msra.mxu0 %v799
    %889 = vmatpush.msra.mxu0 %v795
    %890 = vmatpush.msra.mxu0 %v791
    %891 = vmatpush.msra.mxu0 %v787
    %892 = vmatpush.msra.mxu0 %v783
    %893 = vmatpush.msra.mxu0 %v779
    %894 = vmatpush.msra.mxu0 %v775
    %895 = vmatpush.msra.mxu0 %v771
    %896 = vmatpush.msra.mxu0 %v767
    %897 = vmatpush.msra.mxu0 %v763
    %898 = vmatpush.msra.mxu0 %v759
    %899 = vmatpush.msra.mxu0 %v755
    %900 = vmatpush.msra.mxu0 %v751
    %901 = vmatmul.f32.gmra.mxu0 %v558
    %v902 = vpop.f32.mrf.mxu0
    %v903 = vadd.f32 %v883, %v902
    %904 = vdwg.mxu0
    %905 = vmatpush.msra.mxu0 %v620
    %906 = vmatpush.msra.mxu0 %v616
    %907 = vmatpush.msra.mxu0 %v612
    %908 = vmatpush.msra.mxu0 %v608
    %909 = vmatpush.msra.mxu0 %v604
    %910 = vmatpush.msra.mxu0 %v600
    %911 = vmatpush.msra.mxu0 %v596
    %912 = vmatpush.msra.mxu0 %v592
    %913 = vmatpush.msra.mxu0 %v588
    %914 = vmatpush.msra.mxu0 %v584
    %915 = vmatpush.msra.mxu0 %v580
    %916 = vmatpush.msra.mxu0 %v576
    %917 = vmatpush.msra.mxu0 %v572
    %918 = vmatpush.msra.mxu0 %v568
    %919 = vmatpush.msra.mxu0 %v564
    %920 = vmatpush.msra.mxu0 %v560
    %921 = vmatmul.f32.gmra.mxu0 %v555
    %v922 = vpop.f32.mrf.mxu0
    %v923 = vadd.f32 %v818, %v922
    %924 = vdwg.mxu0
    %925 = vmatpush.msra.mxu0 %v684
    %926 = vmatpush.msra.mxu0 %v680
    %927 = vmatpush.msra.mxu0 %v676
    %928 = vmatpush.msra.mxu0 %v672
    %929 = vmatpush.msra.mxu0 %v668
    %930 = vmatpush.msra.mxu0 %v664
    %931 = vmatpush.msra.mxu0 %v660
    %932 = vmatpush.msra.mxu0 %v656
    %933 = vmatpush.msra.mxu0 %v652
    %934 = vmatpush.msra.mxu0 %v648
    %935 = vmatpush.msra.mxu0 %v644
    %936 = vmatpush.msra.mxu0 %v640
    %937 = vmatpush.msra.mxu0 %v636
    %938 = vmatpush.msra.mxu0 %v632
    %939 = vmatpush.msra.mxu0 %v628
    %940 = vmatpush.msra.mxu0 %v624
    %941 = vmatmul.f32.gmra.mxu0 %v556
    %v942 = vpop.f32.mrf.mxu0
    %v943 = vadd.f32 %v923, %v942
    %944 = vdwg.mxu0
    %945 = vmatpush.msra.mxu0 %v748
    %946 = vmatpush.msra.mxu0 %v744
    %947 = vmatpush.msra.mxu0 %v740
    %948 = vmatpush.msra.mxu0 %v736
    %949 = vmatpush.msra.mxu0 %v732
    %950 = vmatpush.msra.mxu0 %v728
    %951 = vmatpush.msra.mxu0 %v724
    %952 = vmatpush.msra.mxu0 %v720
    %953 = vmatpush.msra.mxu0 %v716
    %954 = vmatpush.msra.mxu0 %v712
    %955 = vmatpush.msra.mxu0 %v708
    %956 = vmatpush.msra.mxu0 %v704
    %957 = vmatpush.msra.mxu0 %v700
    %958 = vmatpush.msra.mxu0 %v696
    %959 = vmatpush.msra.mxu0 %v692
    %960 = vmatpush.msra.mxu0 %v688
    %961 = vmatmul.f32.gmra.mxu0 %v557
    %v962 = vpop.f32.mrf.mxu0
    %v963 = vadd.f32 %v943, %v962
    %964 = vdwg.mxu0
    %965 = vmatpush.msra.mxu0 %v812
    %966 = vmatpush.msra.mxu0 %v808
    %967 = vmatpush.msra.mxu0 %v804
    %968 = vmatpush.msra.mxu0 %v800
    %969 = vmatpush.msra.mxu0 %v796
    %970 = vmatpush.msra.mxu0 %v792
    %971 = vmatpush.msra.mxu0 %v788
    %972 = vmatpush.msra.mxu0 %v784
    %973 = vmatpush.msra.mxu0 %v780
    %974 = vmatpush.msra.mxu0 %v776
    %975 = vmatpush.msra.mxu0 %v772
    %976 = vmatpush.msra.mxu0 %v768
    %977 = vmatpush.msra.mxu0 %v764
    %978 = vmatpush.msra.mxu0 %v760
    %979 = vmatpush.msra.mxu0 %v756
    %980 = vmatpush.msra.mxu0 %v752
    %981 = vmatmul.f32.gmra.mxu0 %v558
    %v982 = vpop.f32.mrf.mxu0
    %v983 = vadd.f32 %v963, %v982
    %984 = vdwg.mxu0
    %985 = vmatpush.msra.mxu0 %v621
    %986 = vmatpush.msra.mxu0 %v617
    %987 = vmatpush.msra.mxu0 %v613
    %988 = vmatpush.msra.mxu0 %v609
    %989 = vmatpush.msra.mxu0 %v605
    %990 = vmatpush.msra.mxu0 %v601
    %991 = vmatpush.msra.mxu0 %v597
    %992 = vmatpush.msra.mxu0 %v593
    %993 = vmatpush.msra.mxu0 %v589
    %994 = vmatpush.msra.mxu0 %v585
    %995 = vmatpush.msra.mxu0 %v581
    %996 = vmatpush.msra.mxu0 %v577
    %997 = vmatpush.msra.mxu0 %v573
    %998 = vmatpush.msra.mxu0 %v569
    %999 = vmatpush.msra.mxu0 %v565
    %1000 = vmatpush.msra.mxu0 %v561
    %1001 = vmatmul.f32.gmra.mxu0 %v555
    %v1002 = vpop.f32.mrf.mxu0
    %v1003 = vadd.f32 %v819, %v1002
    %1004 = vdwg.mxu0
    %1005 = vmatpush.msra.mxu0 %v685
    %1006 = vmatpush.msra.mxu0 %v681
    %1007 = vmatpush.msra.mxu0 %v677
    %1008 = vmatpush.msra.mxu0 %v673
    %1009 = vmatpush.msra.mxu0 %v669
    %1010 = vmatpush.msra.mxu0 %v665
    %1011 = vmatpush.msra.mxu0 %v661
    %1012 = vmatpush.msra.mxu0 %v657
    %1013 = vmatpush.msra.mxu0 %v653
    %1014 = vmatpush.msra.mxu0 %v649
    %1015 = vmatpush.msra.mxu0 %v645
    %1016 = vmatpush.msra.mxu0 %v641
    %1017 = vmatpush.msra.mxu0 %v637
    %1018 = vmatpush.msra.mxu0 %v633
    %1019 = vmatpush.msra.mxu0 %v629
    %1020 = vmatpush.msra.mxu0 %v625
    %1021 = vmatmul.f32.gmra.mxu0 %v556
    %v1022 = vpop.f32.mrf.mxu0
    %v1023 = vadd.f32 %v1003, %v1022
    %1024 = vdwg.mxu0
    %1025 = vmatpush.msra.mxu0 %v749
    %1026 = vmatpush.msra.mxu0 %v745
    %1027 = vmatpush.msra.mxu0 %v741
    %1028 = vmatpush.msra.mxu0 %v737
    %1029 = vmatpush.msra.mxu0 %v733
    %1030 = vmatpush.msra.mxu0 %v729
    %1031 = vmatpush.msra.mxu0 %v725
    %1032 = vmatpush.msra.mxu0 %v721
    %1033 = vmatpush.msra.mxu0 %v717
    %1034 = vmatpush.msra.mxu0 %v713
    %1035 = vmatpush.msra.mxu0 %v709
    %1036 = vmatpush.msra.mxu0 %v705
    %1037 = vmatpush.msra.mxu0 %v701
    %1038 = vmatpush.msra.mxu0 %v697
    %1039 = vmatpush.msra.mxu0 %v693
    %1040 = vmatpush.msra.mxu0 %v689
    %1041 = vmatmul.f32.gmra.mxu0 %v557
    %v1042 = vpop.f32.mrf.mxu0
    %v1043 = vadd.f32 %v1023, %v1042
    %1044 = vdwg.mxu0
    %1045 = vmatpush.msra.mxu0 %v813
    %1046 = vmatpush.msra.mxu0 %v809
    %1047 = vmatpush.msra.mxu0 %v805
    %1048 = vmatpush.msra.mxu0 %v801
    %1049 = vmatpush.msra.mxu0 %v797
    %1050 = vmatpush.msra.mxu0 %v793
    %1051 = vmatpush.msra.mxu0 %v789
    %1052 = vmatpush.msra.mxu0 %v785
    %1053 = vmatpush.msra.mxu0 %v781
    %1054 = vmatpush.msra.mxu0 %v777
    %1055 = vmatpush.msra.mxu0 %v773
    %1056 = vmatpush.msra.mxu0 %v769
    %1057 = vmatpush.msra.mxu0 %v765
    %1058 = vmatpush.msra.mxu0 %v761
    %1059 = vmatpush.msra.mxu0 %v757
    %1060 = vmatpush.msra.mxu0 %v753
    %1061 = vmatmul.f32.gmra.mxu0 %v558
    %v1062 = vpop.f32.mrf.mxu0
    %v1063 = vadd.f32 %v1043, %v1062
    %1064 = vdwg.mxu0
    %1065 = vmatpush.msra.mxu0 %v622
    %1066 = vmatpush.msra.mxu0 %v618
    %1067 = vmatpush.msra.mxu0 %v614
    %1068 = vmatpush.msra.mxu0 %v610
    %1069 = vmatpush.msra.mxu0 %v606
    %1070 = vmatpush.msra.mxu0 %v602
    %1071 = vmatpush.msra.mxu0 %v598
    %1072 = vmatpush.msra.mxu0 %v594
    %1073 = vmatpush.msra.mxu0 %v590
    %1074 = vmatpush.msra.mxu0 %v586
    %1075 = vmatpush.msra.mxu0 %v582
    %1076 = vmatpush.msra.mxu0 %v578
    %1077 = vmatpush.msra.mxu0 %v574
    %1078 = vmatpush.msra.mxu0 %v570
    %1079 = vmatpush.msra.mxu0 %v566
    %1080 = vmatpush.msra.mxu0 %v562
    %1081 = vmatmul.f32.gmra.mxu0 %v555
    %v1082 = vpop.f32.mrf.mxu0
    %v1083 = vadd.f32 %v820, %v1082
    %1084 = vdwg.mxu0
    %1085 = vmatpush.msra.mxu0 %v686
    %1086 = vmatpush.msra.mxu0 %v682
    %1087 = vmatpush.msra.mxu0 %v678
    %1088 = vmatpush.msra.mxu0 %v674
    %1089 = vmatpush.msra.mxu0 %v670
    %1090 = vmatpush.msra.mxu0 %v666
    %1091 = vmatpush.msra.mxu0 %v662
    %1092 = vmatpush.msra.mxu0 %v658
    %1093 = vmatpush.msra.mxu0 %v654
    %1094 = vmatpush.msra.mxu0 %v650
    %1095 = vmatpush.msra.mxu0 %v646
    %1096 = vmatpush.msra.mxu0 %v642
    %1097 = vmatpush.msra.mxu0 %v638
    %1098 = vmatpush.msra.mxu0 %v634
    %1099 = vmatpush.msra.mxu0 %v630
    %1100 = vmatpush.msra.mxu0 %v626
    %1101 = vmatmul.f32.gmra.mxu0 %v556
    %v1102 = vpop.f32.mrf.mxu0
    %v1103 = vadd.f32 %v1083, %v1102
    %1104 = vdwg.mxu0
    %1105 = vmatpush.msra.mxu0 %v750
    %1106 = vmatpush.msra.mxu0 %v746
    %1107 = vmatpush.msra.mxu0 %v742
    %1108 = vmatpush.msra.mxu0 %v738
    %1109 = vmatpush.msra.mxu0 %v734
    %1110 = vmatpush.msra.mxu0 %v730
    %1111 = vmatpush.msra.mxu0 %v726
    %1112 = vmatpush.msra.mxu0 %v722
    %1113 = vmatpush.msra.mxu0 %v718
    %1114 = vmatpush.msra.mxu0 %v714
    %1115 = vmatpush.msra.mxu0 %v710
    %1116 = vmatpush.msra.mxu0 %v706
    %1117 = vmatpush.msra.mxu0 %v702
    %1118 = vmatpush.msra.mxu0 %v698
    %1119 = vmatpush.msra.mxu0 %v694
    %1120 = vmatpush.msra.mxu0 %v690
    %1121 = vmatmul.f32.gmra.mxu0 %v557
    %v1122 = vpop.f32.mrf.mxu0
    %v1123 = vadd.f32 %v1103, %v1122
    %1124 = vdwg.mxu0
    %1125 = vmatpush.msra.mxu0 %v814
    %1126 = vmatpush.msra.mxu0 %v810
    %1127 = vmatpush.msra.mxu0 %v806
    %1128 = vmatpush.msra.mxu0 %v802
    %1129 = vmatpush.msra.mxu0 %v798
    %1130 = vmatpush.msra.mxu0 %v794
    %1131 = vmatpush.msra.mxu0 %v790
    %1132 = vmatpush.msra.mxu0 %v786
    %1133 = vmatpush.msra.mxu0 %v782
    %1134 = vmatpush.msra.mxu0 %v778
    %1135 = vmatpush.msra.mxu0 %v774
    %1136 = vmatpush.msra.mxu0 %v770
    %1137 = vmatpush.msra.mxu0 %v766
    %1138 = vmatpush.msra.mxu0 %v762
    %1139 = vmatpush.msra.mxu0 %v758
    %1140 = vmatpush.msra.mxu0 %v754
    %1141 = vmatmul.f32.gmra.mxu0 %v558
    %v1142 = vpop.f32.mrf.mxu0
    %v1143 = vadd.f32 %v1123, %v1142
    %1144 = vdwg.mxu0
    %v1145 = vld [vmem:[%s5] sm:$0x1]
    %v1146 = vld [vmem:[%s6] sm:$0x1]
    %1147 = vadd.xlane.f32.xlu0 %v903
    %v1148 = vpop.xlane.xlu0 %1147
    %v1149 = vrcp.pop 128.0
    %v1150 = vmul.f32 128.0, %v1149
    %v1151 = vsub.f32 1.0, %v1150
    %v1152 = vmul.f32 %v1149, %v1151
    %v1153 = vadd.f32 %v1149, %v1152
    %vm1154 = vweird.f32 %v1149
    %v1155 = vsel %vm1154, %v1149, %v1153
    %v1156 = vmul.f32 %v1148, %v1155
    %v1157 = vsub.f32 %v903, %v1156
    %v1158 = vmul.f32 %v1157, %v1157
    %1159 = vadd.xlane.f32.xlu0 %v1158
    %v1160 = vpop.xlane.xlu0 %1159
    %v1161 = vmul.f32 %v1160, %v1155
    %v1162 = vadd.f32 %v1161, 1e-05
    %v1163 = vrsqrt.pop %v1162
    %v1164 = vmul.f32 %v1163, %v1162
    %v1165 = vmul.f32 %v1164, %v1163
    %v1166 = vmul.f32 0.5, %v1165
    %v1167 = vsub.f32 1.5, %v1166
    %v1168 = vmul.f32 %v1163, %v1167
    %vm1169 = vweird.f32 %v1162
    %vm1170 = vweird.f32 %v1163
    %vm1171 = vmor %vm1169, %vm1170
    %v1172 = vsel %vm1171, %v1163, %v1168
    %v1173 = vmul.f32 %v1157, %v1172
    %v1175 = vperm.slane %v1145, 0
    %v1177 = vmul.f32 %v1173, %v1175
    %v1179 = vperm.slane %v1146, 0
    %v1181 = vadd.f32 %v1177, %v1179
    %1182 = vst [vmem:[#allocation11] sm:$0xff] %v1181
    %1183 = vadd.xlane.f32.xlu0 %v983
    %v1184 = vpop.xlane.xlu0 %1183
    %v1185 = vmul.f32 %v1184, %v1155
    %v1186 = vsub.f32 %v983, %v1185
    %v1187 = vmul.f32 %v1186, %v1186
    %1188 = vadd.xlane.f32.xlu0 %v1187
    %v1189 = vpop.xlane.xlu0 %1188
    %v1190 = vmul.f32 %v1189, %v1155
    %v1191 = vadd.f32 %v1190, 1e-05
    %v1192 = vrsqrt.pop %v1191
    %v1193 = vmul.f32 %v1192, %v1191
    %v1194 = vmul.f32 %v1193, %v1192
    %v1195 = vmul.f32 0.5, %v1194
    %v1196 = vsub.f32 1.5, %v1195
    %v1197 = vmul.f32 %v1192, %v1196
    %vm1198 = vweird.f32 %v1191
    %vm1199 = vweird.f32 %v1192
    %vm1200 = vmor %vm1198, %vm1199
    %v1201 = vsel %vm1200, %v1192, %v1197
    %v1202 = vmul.f32 %v1186, %v1201
    %v1203 = vmul.f32 %v1202, %v1175
    %v1204 = vadd.f32 %v1203, %v1179
    %1205 = vst [vmem:[#allocation11 + $0x8] sm:$0xff] %v1204
    %1206 = vadd.xlane.f32.xlu0 %v1063
    %v1207 = vpop.xlane.xlu0 %1206
    %v1208 = vmul.f32 %v1207, %v1155
    %v1209 = vsub.f32 %v1063, %v1208
    %v1210 = vmul.f32 %v1209, %v1209
    %1211 = vadd.xlane.f32.xlu0 %v1210
    %v1212 = vpop.xlane.xlu0 %1211
    %v1213 = vmul.f32 %v1212, %v1155
    %v1214 = vadd.f32 %v1213, 1e-05
    %v1215 = vrsqrt.pop %v1214
    %v1216 = vmul.f32 %v1215, %v1214
    %v1217 = vmul.f32 %v1216, %v1215
    %v1218 = vmul.f32 0.5, %v1217
    %v1219 = vsub.f32 1.5, %v1218
    %v1220 = vmul.f32 %v1215, %v1219
    %vm1221 = vweird.f32 %v1214
    %vm1222 = vweird.f32 %v1215
    %vm1223 = vmor %vm1221, %vm1222
    %v1224 = vsel %vm1223, %v1215, %v1220
    %v1225 = vmul.f32 %v1209, %v1224
    %v1226 = vmul.f32 %v1225, %v1175
    %v1227 = vadd.f32 %v1226, %v1179
    %1228 = vst [vmem:[#allocation11 + $0x10] sm:$0xff] %v1227
    %1229 = vadd.xlane.f32.xlu0 %v1143
    %v1230 = vpop.xlane.xlu0 %1229
    %v1231 = vmul.f32 %v1230, %v1155
    %v1232 = vsub.f32 %v1143, %v1231
    %v1233 = vmul.f32 %v1232, %v1232
    %1234 = vadd.xlane.f32.xlu0 %v1233
    %v1235 = vpop.xlane.xlu0 %1234
    %v1236 = vmul.f32 %v1235, %v1155
    %v1237 = vadd.f32 %v1236, 1e-05
    %v1238 = vrsqrt.pop %v1237
    %v1239 = vmul.f32 %v1238, %v1237
    %v1240 = vmul.f32 %v1239, %v1238
    %v1241 = vmul.f32 0.5, %v1240
    %v1242 = vsub.f32 1.5, %v1241
    %v1243 = vmul.f32 %v1238, %v1242
    %vm1244 = vweird.f32 %v1237
    %vm1245 = vweird.f32 %v1238
    %vm1246 = vmor %vm1244, %vm1245
    %v1247 = vsel %vm1246, %v1238, %v1243
    %v1248 = vmul.f32 %v1232, %v1247
    %v1249 = vmul.f32 %v1248, %v1175
    %v1250 = vadd.f32 %v1249, %v1179
    %1251 = vst [vmem:[#allocation11 + $0x18] sm:$0xff] %v1250
    // Predicated region
    $region50: #{tpu_custom_call.1} parent=1 // pred_check
      _
    $region51: #{tpu_custom_call.1} parent=1 // pred_check_branch
      %1253 = sbr.rel (0) target = $region53
    $region52: #{tpu_custom_call.1} parent=1 // pred_region
      %1255 = vsyncadd [#allocation4], 0
      %s1257 = sshll.u32 [#allocation11], 4
      %s1258 = int_to_ptr.vmem [resolvable:$true] %s1257
      %s1259 = sshll.u32 %s7, 4
      %s1260 = int_to_ptr.hbm [resolvable:$true] %s1259
      %1262 = dma.vmem_to_hbm [thread:$0]  %s1258, 512, %s1260, [#allocation4]
    $region53: #{tpu_custom_call.1} parent=1 // pred_fallthru
      _
    // Predicated region
    $region54: #{tpu_custom_call.1} parent=1 // pred_check
      _
    $region55: #{tpu_custom_call.1} parent=1 // pred_check_branch
      %1264 = sbr.rel (0) target = $region57
    $region56: #{tpu_custom_call.1} parent=1 // pred_region
      %1266 = dma.done [#allocation4], 512
    $region57: #{tpu_custom_call.1} parent=1 // pred_fallthru
      _
    %1267 = vsyncpa [#allocation3], 1
    %1268 = vsyncpa [#allocation6], 1
    %1269 = vsyncpa [#allocation9], 1
    %1270 = vsyncpa [#allocation4], 1

</llo_original>
